<compile_context>
chip_gen: v7x
topology: tpu7x:2x2x1
jax: 0.10.0
libtpu: 0.0.40
codegen_flags: <defaults>
</compile_context>

<pallas_src>
import functools

import jax
import jax.numpy as jnp
import numpy as np
from jax.experimental import pallas as pl
from jax.experimental.pallas import tpu as pltpu

N = 4            # batch (only free dim; the module fixes the rest)
C = 256          # channels (Linear(512,256) => 2*C == 512)
D = H = W = 8    # spatial dims (full-window stride-1 pool => global pool)
S = D * H * W    # 512 flattened spatial positions
F = 2 * C        # fused feature dim (avg || max) = 512
H1 = 256
H2 = 64
OUT = 2
OUT_PAD = 128    # lane-dense output slab; real logits live in lanes [0, 2)


def surv_kernel(x_ref, w1a_ref, w1b_ref, b1_ref, w2_ref, b2_ref, w3_ref, b3_ref,
                out_ref):
    """One grid step = one batch half: global pools + the full tiny MLP."""
    x = x_ref[...]                                     # (nb, C, S) wire dtype
    # Global spatial pools (lane-axis reductions -> XLU).  Sum accumulates in
    # f32; max is order/cast invariant so it runs in the wire dtype.
    xsum = jnp.sum(x.astype(jnp.float32), axis=-1)     # (nb, C)
    xmax = jnp.max(x, axis=-1).astype(jnp.float32)     # (nb, C)

    # feature_fusion_layer + Hidder_layer_1:
    #   concat([avg, max]) @ W1  ==  avg @ W1[:C] + max @ W1[C:]
    # The 1/S mean scale is folded into w1a offline (exact: S is a power of 2).
    # TODO(synk): Dropout(p=0.2) is identity in eval mode; training-mode mask
    # is not implemented.
    h1 = jnp.dot(xsum, w1a_ref[...], preferred_element_type=jnp.float32)
    h1 = h1 + jnp.dot(xmax, w1b_ref[...], preferred_element_type=jnp.float32)
    h1 = jnp.maximum(h1 + b1_ref[...], 0.0)            # ReLU

    h2 = jnp.dot(h1, w2_ref[...], preferred_element_type=jnp.float32)
    h2 = jnp.maximum(h2 + b2_ref[...], 0.0)            # Hidder_layer_2 + ReLU

    # classifier (W3/b3 zero-padded to 128 lanes -> unmasked lane-dense store)
    out = jnp.dot(h2, w3_ref[...], preferred_element_type=jnp.float32)
    out_ref[...] = (out + b3_ref[...]).astype(out_ref.dtype)


def prepare_params(params, weight_dtype=jnp.bfloat16):
    """One-time weight preprocessing (split / fold-scale / pad / cast).

    Call once at load time, NOT per forward call, so the dtype cast never
    shows up as per-step HBM traffic.
    """
    w1, b1 = params["w1"], params["b1"]
    w2, b2 = params["w2"], params["b2"]
    w3, b3 = params["w3"], params["b3"]
    w1a = (w1[:C] * (1.0 / S)).astype(weight_dtype)     # avg half, mean folded in
    w1b = w1[C:].astype(weight_dtype)                   # max half
    w3p = jnp.zeros((w3.shape[0], OUT_PAD), jnp.float32).at[:, :OUT].set(w3)
    b3p = jnp.zeros((1, OUT_PAD), jnp.float32).at[:, :OUT].set(b3)
    return {
        "w1a": w1a, "w1b": w1b, "b1": b1.astype(jnp.float32),
        "w2": w2.astype(weight_dtype), "b2": b2.astype(jnp.float32),
        "w3": w3p.astype(weight_dtype), "b3": b3p,
    }


@jax.jit
def surv_network_forward(x, prepped):
    """x: (N, C, D, H, W).  Returns (N, 2) float32 logits.

    x is read in its native layout/dtype (no transpose/cast pre-pass); weight
    dtype on the wire is whatever `prepare_params` produced (bf16 default,
    f32 accumulation either way).
    """
    n, c, d, h, w = x.shape
    s = d * h * w
    x3 = x.reshape(n, c, s)                      # contiguous merge: no HBM copy

    nb = n // 2 if (n % 2 == 0 and n >= 2) else n   # batch rows per grid step
    n_blocks = n // nb                               # 2 -> megacore on v7x

    def const(arr):
        nd = arr.ndim
        return pl.BlockSpec(arr.shape, lambda i, _nd=nd: (0,) * _nd)

    out = pl.pallas_call(
        surv_kernel,
        out_shape=jax.ShapeDtypeStruct((n_blocks, nb, OUT_PAD), jnp.float32),
        grid=(n_blocks,),
        in_specs=[
            pl.BlockSpec((nb, c, s), lambda i: (i, 0, 0)),   # x batch half
            const(prepped["w1a"]), const(prepped["w1b"]), const(prepped["b1"]),
            const(prepped["w2"]), const(prepped["b2"]),
            const(prepped["w3"]), const(prepped["b3"]),
        ],
        out_specs=pl.BlockSpec((None, nb, OUT_PAD), lambda i: (i, 0, 0)),
        compiler_params=pltpu.CompilerParams(
            dimension_semantics=("parallel",),   # batch halves are independent
            vmem_limit_bytes=16 << 20),          # ample even for f32 x + weights
    )(x3, prepped["w1a"], prepped["w1b"], prepped["b1"],
      prepped["w2"], prepped["b2"], prepped["w3"], prepped["b3"])
    return out.reshape(n, OUT_PAD)[:, :OUT]


def init_params(key):
    """Deterministic init mimicking nn.Linear default: U(-1/sqrt(fan_in), +)."""
    ks = jax.random.split(key, 6)

    def lin(kw, kb, fan_in, fan_out):
        bound = 1.0 / np.sqrt(fan_in)
        wgt = jax.random.uniform(kw, (fan_in, fan_out), jnp.float32, -bound, bound)
        bia = jax.random.uniform(kb, (1, fan_out), jnp.float32, -bound, bound)
        return wgt, bia

    w1, b1 = lin(ks[0], ks[1], F, H1)     # Hidder_layer_1: Linear(512, 256)
    w2, b2 = lin(ks[2], ks[3], H1, H2)    # Hidder_layer_2: Linear(256, 64)
    w3, b3 = lin(ks[4], ks[5], H2, OUT)   # classifier:     Linear(64, 2)
    return {"w1": w1, "b1": b1, "w2": w2, "b2": b2, "w3": w3, "b3": b3}


def reference_forward(x, params, weight_dtype=jnp.float32):
    """Pure-jnp reference of the PyTorch forward (eval mode).

    `weight_dtype` quantizes the weights the same way the kernel's wire dtype
    does (x always stays f32, matching the kernel path).
    """
    n = x.shape[0]
    xf = x.reshape(n, C, -1).astype(jnp.float32)
    avg = jnp.mean(xf, axis=-1)
    mx = jnp.max(xf, axis=-1)
    feat = jnp.concatenate([avg, mx], axis=-1)
    q = lambda wgt: wgt.astype(weight_dtype).astype(jnp.float32)
    h1 = jnp.maximum(feat @ q(params["w1"]) + params["b1"], 0.0)
    h2 = jnp.maximum(h1 @ q(params["w2"]) + params["b2"], 0.0)
    return h2 @ q(params["w3"]) + params["b3"]


if __name__ == "__main__":
    key = jax.random.PRNGKey(0)
    kx, kp = jax.random.split(key)

    x = jax.random.normal(kx, (N, C, D, H, W), jnp.float32)
    params = init_params(kp)

    # Default deployment path: bf16 weights on the wire, f32 accumulation.
    prepped_bf16 = prepare_params(params, jnp.bfloat16)
    out_bf = jax.block_until_ready(surv_network_forward(x, prepped_bf16))
    ref_bf = reference_forward(x, params, jnp.bfloat16)
    np.testing.assert_allclose(np.asarray(out_bf), np.asarray(ref_bf),
                               rtol=1e-4, atol=1e-4)

    # Exact-f32 path (parity with the PyTorch f32 model).
    prepped_f32 = prepare_params(params, jnp.float32)
    out_f32 = jax.block_until_ready(surv_network_forward(x, prepped_f32))
    ref_f32 = reference_forward(x, params, jnp.float32)
    np.testing.assert_allclose(np.asarray(out_f32), np.asarray(ref_f32),
                               rtol=1e-5, atol=5e-5)

    assert out_bf.shape == (N, OUT) and out_f32.shape == (N, OUT)
    print("KERNEL_OK")
</pallas_src>

<mosaic_0001>
module attributes {stable_mosaic.version = 11 : i64} {
  func.func @surv_kernel(%arg0: i32, %arg1: memref<2x256x512xf32, #tpu.memory_space<vmem>>, %arg2: memref<256x256xbf16, #tpu.memory_space<vmem>>, %arg3: memref<256x256xbf16, #tpu.memory_space<vmem>>, %arg4: memref<1x256xf32, #tpu.memory_space<vmem>>, %arg5: memref<256x64xbf16, #tpu.memory_space<vmem>>, %arg6: memref<1x64xf32, #tpu.memory_space<vmem>>, %arg7: memref<64x128xbf16, #tpu.memory_space<vmem>>, %arg8: memref<1x128xf32, #tpu.memory_space<vmem>>, %arg9: memref<1x2x128xf32, #tpu.memory_space<vmem>>) attributes {dimension_semantics = [#tpu.dimension_semantics<parallel>], iteration_bounds = array<i64: 2>, scalar_prefetch = 0 : i64, scratch_operands = 0 : i64, tpu.core_type = #tpu.core_type<tc>, window_params = [{transform_indices = @transform_0, window_bounds = array<i64: 2, 256, 512>}, {pipeline_mode = #tpu.pipeline_mode<synchronous>, transform_indices = @transform_1, window_bounds = array<i64: 256, 256>}, {pipeline_mode = #tpu.pipeline_mode<synchronous>, transform_indices = @transform_2, window_bounds = array<i64: 256, 256>}, {pipeline_mode = #tpu.pipeline_mode<synchronous>, transform_indices = @transform_3, window_bounds = array<i64: 1, 256>}, {pipeline_mode = #tpu.pipeline_mode<synchronous>, transform_indices = @transform_4, window_bounds = array<i64: 256, 64>}, {pipeline_mode = #tpu.pipeline_mode<synchronous>, transform_indices = @transform_5, window_bounds = array<i64: 1, 64>}, {pipeline_mode = #tpu.pipeline_mode<synchronous>, transform_indices = @transform_6, window_bounds = array<i64: 64, 128>}, {pipeline_mode = #tpu.pipeline_mode<synchronous>, transform_indices = @transform_7, window_bounds = array<i64: 1, 128>}, {transform_indices = @transform_8, window_bounds = array<i64: 1, 2, 128>}]} {
    %c0 = arith.constant 0 : index
    %c0_0 = arith.constant 0 : index
    %c0_1 = arith.constant 0 : index
    %0 = vector.load %arg1[%c0, %c0_0, %c0_1] : memref<2x256x512xf32, #tpu.memory_space<vmem>>, vector<2x256x512xf32>
    %cst = arith.constant dense<0.000000e+00> : vector<2x256xf32>
    %1 = vector.multi_reduction <add>, %0, %cst [2] : vector<2x256x512xf32> to vector<2x256xf32>
    %cst_2 = arith.constant dense<0xFF800000> : vector<2x256xf32>
    %2 = vector.multi_reduction <maximumf>, %0, %cst_2 [2] : vector<2x256x512xf32> to vector<2x256xf32>
    %c0_3 = arith.constant 0 : index
    %c0_4 = arith.constant 0 : index
    %3 = vector.load %arg2[%c0_3, %c0_4] : memref<256x256xbf16, #tpu.memory_space<vmem>>, vector<256x256xbf16>
    %cst_5 = arith.constant dense<0.000000e+00> : vector<2x256xf32>
    %4 = tpu.matmul %1, %3, %cst_5 {dimension_numbers = #tpu.dot_dimension_numbers<[1], [0], [0], [1], [0, 0, 1, 1], [], []>} : vector<2x256xf32>, vector<256x256xbf16>, vector<2x256xf32> -> vector<2x256xf32>
    %c0_6 = arith.constant 0 : index
    %c0_7 = arith.constant 0 : index
    %5 = vector.load %arg3[%c0_6, %c0_7] : memref<256x256xbf16, #tpu.memory_space<vmem>>, vector<256x256xbf16>
    %cst_8 = arith.constant dense<0.000000e+00> : vector<2x256xf32>
    %6 = tpu.matmul %2, %5, %cst_8 {dimension_numbers = #tpu.dot_dimension_numbers<[1], [0], [0], [1], [0, 0, 1, 1], [], []>} : vector<2x256xf32>, vector<256x256xbf16>, vector<2x256xf32> -> vector<2x256xf32>
    %7 = arith.addf %4, %6 : vector<2x256xf32>
    %c0_9 = arith.constant 0 : index
    %c0_10 = arith.constant 0 : index
    %8 = vector.load %arg4[%c0_9, %c0_10] : memref<1x256xf32, #tpu.memory_space<vmem>>, vector<1x256xf32>
    %9 = vector.broadcast %8 : vector<1x256xf32> to vector<2x256xf32>
    %10 = arith.addf %7, %9 : vector<2x256xf32>
    %cst_11 = arith.constant 0.000000e+00 : f32
    %11 = vector.broadcast %cst_11 : f32 to vector<2x256xf32>
    %12 = arith.maximumf %10, %11 : vector<2x256xf32>
    %c0_12 = arith.constant 0 : index
    %c0_13 = arith.constant 0 : index
    %13 = vector.load %arg5[%c0_12, %c0_13] : memref<256x64xbf16, #tpu.memory_space<vmem>>, vector<256x64xbf16>
    %cst_14 = arith.constant dense<0.000000e+00> : vector<2x64xf32>
    %14 = tpu.matmul %12, %13, %cst_14 {dimension_numbers = #tpu.dot_dimension_numbers<[1], [0], [0], [1], [0, 0, 1, 1], [], []>} : vector<2x256xf32>, vector<256x64xbf16>, vector<2x64xf32> -> vector<2x64xf32>
    %c0_15 = arith.constant 0 : index
    %c0_16 = arith.constant 0 : index
    %15 = vector.load %arg6[%c0_15, %c0_16] : memref<1x64xf32, #tpu.memory_space<vmem>>, vector<1x64xf32>
    %16 = vector.broadcast %15 : vector<1x64xf32> to vector<2x64xf32>
    %17 = arith.addf %14, %16 : vector<2x64xf32>
    %cst_17 = arith.constant 0.000000e+00 : f32
    %18 = vector.broadcast %cst_17 : f32 to vector<2x64xf32>
    %19 = arith.maximumf %17, %18 : vector<2x64xf32>
    %c0_18 = arith.constant 0 : index
    %c0_19 = arith.constant 0 : index
    %20 = vector.load %arg7[%c0_18, %c0_19] : memref<64x128xbf16, #tpu.memory_space<vmem>>, vector<64x128xbf16>
    %cst_20 = arith.constant dense<0.000000e+00> : vector<2x128xf32>
    %21 = tpu.matmul %19, %20, %cst_20 {dimension_numbers = #tpu.dot_dimension_numbers<[1], [0], [0], [1], [0, 0, 1, 1], [], []>} : vector<2x64xf32>, vector<64x128xbf16>, vector<2x128xf32> -> vector<2x128xf32>
    %c0_21 = arith.constant 0 : index
    %c0_22 = arith.constant 0 : index
    %22 = vector.load %arg8[%c0_21, %c0_22] : memref<1x128xf32, #tpu.memory_space<vmem>>, vector<1x128xf32>
    %23 = vector.broadcast %22 : vector<1x128xf32> to vector<2x128xf32>
    %24 = arith.addf %21, %23 : vector<2x128xf32>
    %c0_23 = arith.constant 0 : index
    %c0_24 = arith.constant 0 : index
    %c0_25 = arith.constant 0 : index
    %25 = vector.load %arg9[%c0_23, %c0_24, %c0_25] : memref<1x2x128xf32, #tpu.memory_space<vmem>>, vector<1x2x128xf32>
    %26 = vector.shape_cast %25 : vector<1x2x128xf32> to vector<2x128xf32>
    %27 = vector.shape_cast %24 : vector<2x128xf32> to vector<1x2x128xf32>
    tpu.vector_store %arg9[%c0_23, %c0_24, %c0_25], %27 {strides = array<i32>} : memref<1x2x128xf32, #tpu.memory_space<vmem>>, vector<1x2x128xf32>,
    return
  }
  func.func @transform_0(%arg0: i32) -> (i32, i32, i32) {
    %c0_i32 = arith.constant 0 : i32
    %c0_i32_0 = arith.constant 0 : i32
    %c0_i32_1 = arith.constant 0 : i32
    return %arg0, %c0_i32, %c0_i32_0 : i32, i32, i32
  }
  func.func @transform_1(%arg0: i32) -> (i32, i32) {
    %c0_i32 = arith.constant 0 : i32
    %c0_i32_0 = arith.constant 0 : i32
    %c0_i32_1 = arith.constant 0 : i32
    return %c0_i32, %c0_i32_0 : i32, i32
  }
  func.func @transform_2(%arg0: i32) -> (i32, i32) {
    %c0_i32 = arith.constant 0 : i32
    %c0_i32_0 = arith.constant 0 : i32
    %c0_i32_1 = arith.constant 0 : i32
    return %c0_i32, %c0_i32_0 : i32, i32
  }
  func.func @transform_3(%arg0: i32) -> (i32, i32) {
    %c0_i32 = arith.constant 0 : i32
    %c0_i32_0 = arith.constant 0 : i32
    %c0_i32_1 = arith.constant 0 : i32
    return %c0_i32, %c0_i32_0 : i32, i32
  }
  func.func @transform_4(%arg0: i32) -> (i32, i32) {
    %c0_i32 = arith.constant 0 : i32
    %c0_i32_0 = arith.constant 0 : i32
    %c0_i32_1 = arith.constant 0 : i32
    return %c0_i32, %c0_i32_0 : i32, i32
  }
  func.func @transform_5(%arg0: i32) -> (i32, i32) {
    %c0_i32 = arith.constant 0 : i32
    %c0_i32_0 = arith.constant 0 : i32
    %c0_i32_1 = arith.constant 0 : i32
    return %c0_i32, %c0_i32_0 : i32, i32
  }
  func.func @transform_6(%arg0: i32) -> (i32, i32) {
    %c0_i32 = arith.constant 0 : i32
    %c0_i32_0 = arith.constant 0 : i32
    %c0_i32_1 = arith.constant 0 : i32
    return %c0_i32, %c0_i32_0 : i32, i32
  }
  func.func @transform_7(%arg0: i32) -> (i32, i32) {
    %c0_i32 = arith.constant 0 : i32
    %c0_i32_0 = arith.constant 0 : i32
    %c0_i32_1 = arith.constant 0 : i32
    return %c0_i32, %c0_i32_0 : i32, i32
  }
  func.func @transform_8(%arg0: i32) -> (i32, i32, i32) {
    %c0_i32 = arith.constant 0 : i32
    %c0_i32_0 = arith.constant 0 : i32
    %c0_i32_1 = arith.constant 0 : i32
    return %arg0, %c0_i32, %c0_i32_0 : i32, i32, i32
  }
}

</mosaic_0001>

<llo_original>
// kernel: surv_network_forward.1
$region0: #{surv_network_forward.1}
  #allocation0 [shape = 'u32[]', space=smem, size = 0x4, offset = 0x4, fixed_abs, tag = 'smem constant byte address 0x4 - core index']
  #allocation1 [shape = 'u32[144,128]{1,0:T(1,128)}', space=vmem, size = 0x12000, scoped, tag = 'internal scratch']
  %s0 = inlined_call_operand.vmem [shape: f32[4,256,512], index: 0, kind: input, shape index: {}]
  %s1 = inlined_call_operand.vmem [shape: bf16[256,256], index: 1, kind: input, shape index: {}]
  %s2 = inlined_call_operand.vmem [shape: bf16[256,256], index: 2, kind: input, shape index: {}]
  %s3 = inlined_call_operand.vmem [shape: f32[1,256], index: 3, kind: input, shape index: {}]
  %s4 = inlined_call_operand.vmem [shape: bf16[256,64], index: 4, kind: input, shape index: {}]
  %s5 = inlined_call_operand.vmem [shape: f32[1,64], index: 5, kind: input, shape index: {}]
  %s6 = inlined_call_operand.vmem [shape: bf16[64,128], index: 6, kind: input, shape index: {}]
  %s7 = inlined_call_operand.vmem [shape: f32[1,128], index: 7, kind: input, shape index: {}]
  %s8 = inlined_call_operand.vmem [shape: f32[2,2,128], index: 8, kind: output, shape index: {}]
  %s9 = sld [smem:[#allocation0]]
  $region65: #{surv_network_forward.1} parent=0
    _
  %s11 = ssub.s32 1, %s9
  %s12 = scalar_select 0, %s11, %s9
  loop: start=0, step=1, limit=4
  $region2: #{surv_network_forward.1} parent=0 // loop_pre_header
    _
  $region3: #{surv_network_forward.1} parent=0 // loop_header
    %s14 = sphi 0, %s18
    %p15 = scmp.ge.s32.totalorder %s14, 4
    %s24 = sphi 0, %s26
    %s27 = sphi 0, %s24
    %s28 = sphi 0, %s27
    %s44 = sphi 0, %s28
    %s48 = sphi 0, %s48
    %s50 = sphi 0, %s48
    %s51 = sphi 0, %s50
    %s65 = sphi 0, %s51
    %s69 = sphi 0, %s69
    %s71 = sphi 0, %s69
    %s72 = sphi 0, %s71
    %s86 = sphi 0, %s72
    %s90 = sphi 0, %s90
    %s92 = sphi 0, %s90
    %s93 = sphi 0, %s92
    %s107 = sphi 0, %s93
    %s111 = sphi 0, %s111
    %s113 = sphi 0, %s111
    %s114 = sphi 0, %s113
    %s128 = sphi 0, %s114
    %s132 = sphi 0, %s132
    %s134 = sphi 0, %s132
    %s135 = sphi 0, %s134
    %s149 = sphi 0, %s135
    %s153 = sphi 0, %s153
    %s155 = sphi 0, %s153
    %s156 = sphi 0, %s155
    %s170 = sphi 0, %s156
    %s174 = sphi 0, %s174
    %s176 = sphi 0, %s174
    %s177 = sphi 0, %s176
    %s191 = sphi 0, %s177
    %s197 = sphi 0, %s199
    %s200 = sphi 0, %s197
    %s201 = sphi 0, %s200
    %s217 = sphi 0, %s201
  $region4: #{surv_network_forward.1} parent=0 // loop_header_branch
    %17 = sbr.rel (%p15) target = $region8
  $region5: #{surv_network_forward.1} parent=0 // loop_body
    %s19 = ssub.s32 %s14, 1
    %s20 = ssub.s32 %s14, 2
    %s21 = sadd.s32 %s14, 1
    %s22 = ssub.s32 %s14, %s21
    %p23 = scmp.eq.s32.totalorder %s22, 0
    %s25 = sadd.s32 %s24, 1
    %s26 = scalar_select %p23, %s24, %s25
    %p29 = pneg %p23
    %p30 = scmp.eq.s32.totalorder %s14, 1
    %p31 = por %p29, %p30
    %p32 = scmp.ne.s32.totalorder %s24, %s27
    %p33 = scmp.eq.s32.totalorder %s14, 0
    %p34 = por %p32, %p33
    %p35 = scmp.ne.s32.totalorder %s24, %s27
    %p36 = scmp.eq.s32.totalorder %s19, 1
    %p37 = por %p35, %p36
    %p38 = scmp.ne.s32.totalorder %s27, %s28
    %p39 = scmp.eq.s32.totalorder %s19, 0
    %p40 = por %p38, %p39
    %p41 = scmp.ne.s32.totalorder %s27, %s28
    %p42 = scmp.eq.s32.totalorder %s20, 1
    %p43 = por %p41, %p42
    %p45 = scmp.ne.s32.totalorder %s28, %s44
    %p46 = scmp.eq.s32.totalorder %s20, 0
    %p47 = por %p45, %p46
    %s49 = sadd.s32 %s48, 1
    %p52 = scmp.eq.s32.totalorder %s14, 1
    %p53 = scmp.ne.s32.totalorder %s48, %s50
    %p54 = scmp.eq.s32.totalorder %s14, 0
    %p55 = por %p53, %p54
    %p56 = scmp.ne.s32.totalorder %s48, %s50
    %p57 = scmp.eq.s32.totalorder %s19, 1
    %p58 = por %p56, %p57
    %p59 = scmp.ne.s32.totalorder %s50, %s51
    %p60 = scmp.eq.s32.totalorder %s19, 0
    %p61 = por %p59, %p60
    %p62 = scmp.ne.s32.totalorder %s50, %s51
    %p63 = scmp.eq.s32.totalorder %s20, 1
    %p64 = por %p62, %p63
    %p66 = scmp.ne.s32.totalorder %s51, %s65
    %p67 = scmp.eq.s32.totalorder %s20, 0
    %p68 = por %p66, %p67
    %s70 = sadd.s32 %s69, 1
    %p73 = scmp.eq.s32.totalorder %s14, 1
    %p74 = scmp.ne.s32.totalorder %s69, %s71
    %p75 = scmp.eq.s32.totalorder %s14, 0
    %p76 = por %p74, %p75
    %p77 = scmp.ne.s32.totalorder %s69, %s71
    %p78 = scmp.eq.s32.totalorder %s19, 1
    %p79 = por %p77, %p78
    %p80 = scmp.ne.s32.totalorder %s71, %s72
    %p81 = scmp.eq.s32.totalorder %s19, 0
    %p82 = por %p80, %p81
    %p83 = scmp.ne.s32.totalorder %s71, %s72
    %p84 = scmp.eq.s32.totalorder %s20, 1
    %p85 = por %p83, %p84
    %p87 = scmp.ne.s32.totalorder %s72, %s86
    %p88 = scmp.eq.s32.totalorder %s20, 0
    %p89 = por %p87, %p88
    %s91 = sadd.s32 %s90, 1
    %p94 = scmp.eq.s32.totalorder %s14, 1
    %p95 = scmp.ne.s32.totalorder %s90, %s92
    %p96 = scmp.eq.s32.totalorder %s14, 0
    %p97 = por %p95, %p96
    %p98 = scmp.ne.s32.totalorder %s90, %s92
    %p99 = scmp.eq.s32.totalorder %s19, 1
    %p100 = por %p98, %p99
    %p101 = scmp.ne.s32.totalorder %s92, %s93
    %p102 = scmp.eq.s32.totalorder %s19, 0
    %p103 = por %p101, %p102
    %p104 = scmp.ne.s32.totalorder %s92, %s93
    %p105 = scmp.eq.s32.totalorder %s20, 1
    %p106 = por %p104, %p105
    %p108 = scmp.ne.s32.totalorder %s93, %s107
    %p109 = scmp.eq.s32.totalorder %s20, 0
    %p110 = por %p108, %p109
    %s112 = sadd.s32 %s111, 1
    %p115 = scmp.eq.s32.totalorder %s14, 1
    %p116 = scmp.ne.s32.totalorder %s111, %s113
    %p117 = scmp.eq.s32.totalorder %s14, 0
    %p118 = por %p116, %p117
    %p119 = scmp.ne.s32.totalorder %s111, %s113
    %p120 = scmp.eq.s32.totalorder %s19, 1
    %p121 = por %p119, %p120
    %p122 = scmp.ne.s32.totalorder %s113, %s114
    %p123 = scmp.eq.s32.totalorder %s19, 0
    %p124 = por %p122, %p123
    %p125 = scmp.ne.s32.totalorder %s113, %s114
    %p126 = scmp.eq.s32.totalorder %s20, 1
    %p127 = por %p125, %p126
    %p129 = scmp.ne.s32.totalorder %s114, %s128
    %p130 = scmp.eq.s32.totalorder %s20, 0
    %p131 = por %p129, %p130
    %s133 = sadd.s32 %s132, 1
    %p136 = scmp.eq.s32.totalorder %s14, 1
    %p137 = scmp.ne.s32.totalorder %s132, %s134
    %p138 = scmp.eq.s32.totalorder %s14, 0
    %p139 = por %p137, %p138
    %p140 = scmp.ne.s32.totalorder %s132, %s134
    %p141 = scmp.eq.s32.totalorder %s19, 1
    %p142 = por %p140, %p141
    %p143 = scmp.ne.s32.totalorder %s134, %s135
    %p144 = scmp.eq.s32.totalorder %s19, 0
    %p145 = por %p143, %p144
    %p146 = scmp.ne.s32.totalorder %s134, %s135
    %p147 = scmp.eq.s32.totalorder %s20, 1
    %p148 = por %p146, %p147
    %p150 = scmp.ne.s32.totalorder %s135, %s149
    %p151 = scmp.eq.s32.totalorder %s20, 0
    %p152 = por %p150, %p151
    %s154 = sadd.s32 %s153, 1
    %p157 = scmp.eq.s32.totalorder %s14, 1
    %p158 = scmp.ne.s32.totalorder %s153, %s155
    %p159 = scmp.eq.s32.totalorder %s14, 0
    %p160 = por %p158, %p159
    %p161 = scmp.ne.s32.totalorder %s153, %s155
    %p162 = scmp.eq.s32.totalorder %s19, 1
    %p163 = por %p161, %p162
    %p164 = scmp.ne.s32.totalorder %s155, %s156
    %p165 = scmp.eq.s32.totalorder %s19, 0
    %p166 = por %p164, %p165
    %p167 = scmp.ne.s32.totalorder %s155, %s156
    %p168 = scmp.eq.s32.totalorder %s20, 1
    %p169 = por %p167, %p168
    %p171 = scmp.ne.s32.totalorder %s156, %s170
    %p172 = scmp.eq.s32.totalorder %s20, 0
    %p173 = por %p171, %p172
    %s175 = sadd.s32 %s174, 1
    %p178 = scmp.eq.s32.totalorder %s14, 1
    %p179 = scmp.ne.s32.totalorder %s174, %s176
    %p180 = scmp.eq.s32.totalorder %s14, 0
    %p181 = por %p179, %p180
    %p182 = scmp.ne.s32.totalorder %s174, %s176
    %p183 = scmp.eq.s32.totalorder %s19, 1
    %p184 = por %p182, %p183
    %p185 = scmp.ne.s32.totalorder %s176, %s177
    %p186 = scmp.eq.s32.totalorder %s19, 0
    %p187 = por %p185, %p186
    %p188 = scmp.ne.s32.totalorder %s176, %s177
    %p189 = scmp.eq.s32.totalorder %s20, 1
    %p190 = por %p188, %p189
    %p192 = scmp.ne.s32.totalorder %s177, %s191
    %p193 = scmp.eq.s32.totalorder %s20, 0
    %p194 = por %p192, %p193
    %s195 = ssub.s32 %s14, %s21
    %p196 = scmp.eq.s32.totalorder %s195, 0
    %s198 = sadd.s32 %s197, 1
    %s199 = scalar_select %p196, %s197, %s198
    %p202 = pneg %p196
    %p203 = scmp.eq.s32.totalorder %s14, 1
    %p204 = por %p202, %p203
    %p205 = scmp.ne.s32.totalorder %s197, %s200
    %p206 = scmp.eq.s32.totalorder %s14, 0
    %p207 = por %p205, %p206
    %p208 = scmp.ne.s32.totalorder %s197, %s200
    %p209 = scmp.eq.s32.totalorder %s19, 1
    %p210 = por %p208, %p209
    %p211 = scmp.ne.s32.totalorder %s200, %s201
    %p212 = scmp.eq.s32.totalorder %s19, 0
    %p213 = por %p211, %p212
    %p214 = scmp.ne.s32.totalorder %s200, %s201
    %p215 = scmp.eq.s32.totalorder %s20, 1
    %p216 = por %p214, %p215
    %p218 = scmp.ne.s32.totalorder %s201, %s217
    %p219 = scmp.eq.s32.totalorder %s20, 0
    %p220 = por %p218, %p219
    %p221 = scmp.le.s32.totalorder 1, %s14
    %p222 = scmp.lt.s32.totalorder %s14, 3
    %p223 = pnand %p221, %p222
    %p224 = pneg %p223
    // Predicated region
    $region9: #{surv_network_forward.1} parent=5 // pred_check
      _
    $region10: #{surv_network_forward.1} parent=5 // pred_check_branch
      %226 = sbr.rel (%p223) target = $region12
    $region11: #{surv_network_forward.1} parent=5 // pred_region
      %s227 = ssub.s32 %s14, 1
      // Predicated region
      $region13: #{surv_network_forward.1} parent=11 // pred_check
        %p228 = pneg %p61
      $region14: #{surv_network_forward.1} parent=11 // pred_check_branch
        %230 = sbr.rel (%p228) target = $region16
      $region15: #{surv_network_forward.1} parent=11 // pred_region
        _
      $region16: #{surv_network_forward.1} parent=11 // pred_fallthru
        _
      // Predicated region
      $region17: #{surv_network_forward.1} parent=11 // pred_check
        %p231 = pneg %p82
      $region18: #{surv_network_forward.1} parent=11 // pred_check_branch
        %233 = sbr.rel (%p231) target = $region20
      $region19: #{surv_network_forward.1} parent=11 // pred_region
        _
      $region20: #{surv_network_forward.1} parent=11 // pred_fallthru
        _
      // Predicated region
      $region21: #{surv_network_forward.1} parent=11 // pred_check
        %p234 = pneg %p103
      $region22: #{surv_network_forward.1} parent=11 // pred_check_branch
        %236 = sbr.rel (%p234) target = $region24
      $region23: #{surv_network_forward.1} parent=11 // pred_region
        _
      $region24: #{surv_network_forward.1} parent=11 // pred_fallthru
        _
      // Predicated region
      $region25: #{surv_network_forward.1} parent=11 // pred_check
        %p237 = pneg %p124
      $region26: #{surv_network_forward.1} parent=11 // pred_check_branch
        %239 = sbr.rel (%p237) target = $region28
      $region27: #{surv_network_forward.1} parent=11 // pred_region
        _
      $region28: #{surv_network_forward.1} parent=11 // pred_fallthru
        _
      // Predicated region
      $region29: #{surv_network_forward.1} parent=11 // pred_check
        %p240 = pneg %p145
      $region30: #{surv_network_forward.1} parent=11 // pred_check_branch
        %242 = sbr.rel (%p240) target = $region32
      $region31: #{surv_network_forward.1} parent=11 // pred_region
        _
      $region32: #{surv_network_forward.1} parent=11 // pred_fallthru
        _
      // Predicated region
      $region33: #{surv_network_forward.1} parent=11 // pred_check
        %p243 = pneg %p166
      $region34: #{surv_network_forward.1} parent=11 // pred_check_branch
        %245 = sbr.rel (%p243) target = $region36
      $region35: #{surv_network_forward.1} parent=11 // pred_region
        _
      $region36: #{surv_network_forward.1} parent=11 // pred_fallthru
        _
      // Predicated region
      $region37: #{surv_network_forward.1} parent=11 // pred_check
        %p246 = pneg %p187
      $region38: #{surv_network_forward.1} parent=11 // pred_check_branch
        %248 = sbr.rel (%p246) target = $region40
      $region39: #{surv_network_forward.1} parent=11 // pred_region
        _
      $region40: #{surv_network_forward.1} parent=11 // pred_fallthru
        _
    $region12: #{surv_network_forward.1} parent=5 // pred_fallthru
      _
    %p249 = scmp.lt.s32.totalorder %s14, 2
    // Predicated region
    $region41: #{surv_network_forward.1} parent=5 // pred_check
      %p250 = pneg %p249
    $region42: #{surv_network_forward.1} parent=5 // pred_check_branch
      %252 = sbr.rel (%p250) target = $region44
    $region43: #{surv_network_forward.1} parent=5 // pred_region
      // Predicated region
      $region45: #{surv_network_forward.1} parent=43 // pred_check
        %p253 = pneg %p34
      $region46: #{surv_network_forward.1} parent=43 // pred_check_branch
        %255 = sbr.rel (%p253) target = $region48
      $region47: #{surv_network_forward.1} parent=43 // pred_region
        %s256 = smul.u32 2, %s14
        %p257 = scmp.lt.s32.totalorder %s256, 3
        %s258 = scalar_select %p257, %s256, 3
        %s259 = smul.addr %s258, 128
        %s260 = smul.addr %s259, 8
        %s261 = scalar_lea.vmem %s0, %s260
        %s262 = smul.u32 2, %s14
      $region48: #{surv_network_forward.1} parent=43 // pred_fallthru
        _
    $region44: #{surv_network_forward.1} parent=5 // pred_fallthru
      _
    %p263 = scmp.le.s32.totalorder 1, %s14
    %p264 = scmp.lt.s32.totalorder %s14, 3
    %p265 = pnand %p263, %p264
    %p266 = pneg %p265
    // Predicated region
    $region49: #{surv_network_forward.1} parent=5 // pred_check
      _
    $region50: #{surv_network_forward.1} parent=5 // pred_check_branch
      %268 = sbr.rel (%p265) target = $region52
    $region51: #{surv_network_forward.1} parent=5 // pred_region
      %s269 = ssub.s32 %s14, 1
      %s270 = smul.u32 2, %s19
      %p271 = scmp.lt.s32.totalorder %s270, 3
      %s272 = scalar_select %p271, %s270, 3
      %s273 = smul.addr %s272, 128
      %s274 = smul.addr %s273, 8
      %s275 = scalar_lea.vmem %s0, %s274
      %p276 = pneg %p40
      %p277 = pneg %p37
      %p278 = pneg %p61
      %p279 = pneg %p58
      %p280 = pneg %p82
      %p281 = pneg %p79
      %p282 = pneg %p103
      %p283 = pneg %p100
      %p284 = pneg %p124
      %p285 = pneg %p121
      %p286 = pneg %p145
      %p287 = pneg %p142
      %p288 = pneg %p166
      %p289 = pneg %p163
      %p290 = pneg %p187
      %p291 = pneg %p184
      %p292 = pneg %p213
      %p293 = pneg %p210
      %p294 = scmp.lt.s32.totalorder %s19, 1
      %s295 = scalar_select %p294, %s19, 1
      %s296 = smul.addr %s295, 2
      %s297 = scalar_lea.vmem %s8, %s296
      %s298 = smul.u32 2, %s19
      %p299 = scmp.lt.s32.totalorder %s298, 3
      %s300 = scalar_select %p299, %s298, 3
      %s301 = smul.addr %s300, 128
      %s302 = smul.addr %s301, 8
      %s303 = scalar_lea.vmem %s0, %s302
      %s304 = smul.u32 2, %s19
      %p305 = scmp.lt.s32.totalorder %s19, 1
      %s306 = scalar_select %p305, %s19, 1
      %s307 = smul.addr %s306, 2
      %s308 = scalar_lea.vmem %s8, %s307
      %v310 = vld [vmem:[%s303] sm:$0xff]
      %v311 = vld [vmem:[%s303 + $0x8] sm:$0xff]
      %v312 = vld [vmem:[%s303 + $0x10] sm:$0xff]
      %v313 = vld [vmem:[%s303 + $0x18] sm:$0xff]
      %v314 = vld [vmem:[%s303 + $0x20] sm:$0xff]
      %v315 = vld [vmem:[%s303 + $0x28] sm:$0xff]
      %v316 = vld [vmem:[%s303 + $0x30] sm:$0xff]
      %v317 = vld [vmem:[%s303 + $0x38] sm:$0xff]
      %v318 = vld [vmem:[%s303 + $0x40] sm:$0xff]
      %v319 = vld [vmem:[%s303 + $0x48] sm:$0xff]
      %v320 = vld [vmem:[%s303 + $0x50] sm:$0xff]
      %v321 = vld [vmem:[%s303 + $0x58] sm:$0xff]
      %v322 = vld [vmem:[%s303 + $0x60] sm:$0xff]
      %v323 = vld [vmem:[%s303 + $0x68] sm:$0xff]
      %v324 = vld [vmem:[%s303 + $0x70] sm:$0xff]
      %v325 = vld [vmem:[%s303 + $0x78] sm:$0xff]
      %v326 = vld [vmem:[%s303 + $0x80] sm:$0xff]
      %v327 = vld [vmem:[%s303 + $0x88] sm:$0xff]
      %v328 = vld [vmem:[%s303 + $0x90] sm:$0xff]
      %v329 = vld [vmem:[%s303 + $0x98] sm:$0xff]
      %v330 = vld [vmem:[%s303 + $0xa0] sm:$0xff]
      %v331 = vld [vmem:[%s303 + $0xa8] sm:$0xff]
      %v332 = vld [vmem:[%s303 + $0xb0] sm:$0xff]
      %v333 = vld [vmem:[%s303 + $0xb8] sm:$0xff]
      %v334 = vld [vmem:[%s303 + $0xc0] sm:$0xff]
      %v335 = vld [vmem:[%s303 + $0xc8] sm:$0xff]
      %v336 = vld [vmem:[%s303 + $0xd0] sm:$0xff]
      %v337 = vld [vmem:[%s303 + $0xd8] sm:$0xff]
      %v338 = vld [vmem:[%s303 + $0xe0] sm:$0xff]
      %v339 = vld [vmem:[%s303 + $0xe8] sm:$0xff]
      %v340 = vld [vmem:[%s303 + $0xf0] sm:$0xff]
      %v341 = vld [vmem:[%s303 + $0xf8] sm:$0xff]
      %v342 = vld [vmem:[%s303 + $0x100] sm:$0xff]
      %v343 = vld [vmem:[%s303 + $0x108] sm:$0xff]
      %v344 = vld [vmem:[%s303 + $0x110] sm:$0xff]
      %v345 = vld [vmem:[%s303 + $0x118] sm:$0xff]
      %v346 = vld [vmem:[%s303 + $0x120] sm:$0xff]
      %v347 = vld [vmem:[%s303 + $0x128] sm:$0xff]
      %v348 = vld [vmem:[%s303 + $0x130] sm:$0xff]
      %v349 = vld [vmem:[%s303 + $0x138] sm:$0xff]
      %v350 = vld [vmem:[%s303 + $0x140] sm:$0xff]
      %v351 = vld [vmem:[%s303 + $0x148] sm:$0xff]
      %v352 = vld [vmem:[%s303 + $0x150] sm:$0xff]
      %v353 = vld [vmem:[%s303 + $0x158] sm:$0xff]
      %v354 = vld [vmem:[%s303 + $0x160] sm:$0xff]
      %v355 = vld [vmem:[%s303 + $0x168] sm:$0xff]
      %v356 = vld [vmem:[%s303 + $0x170] sm:$0xff]
      %v357 = vld [vmem:[%s303 + $0x178] sm:$0xff]
      %v358 = vld [vmem:[%s303 + $0x180] sm:$0xff]
      %v359 = vld [vmem:[%s303 + $0x188] sm:$0xff]
      %v360 = vld [vmem:[%s303 + $0x190] sm:$0xff]
      %v361 = vld [vmem:[%s303 + $0x198] sm:$0xff]
      %v362 = vld [vmem:[%s303 + $0x1a0] sm:$0xff]
      %v363 = vld [vmem:[%s303 + $0x1a8] sm:$0xff]
      %v364 = vld [vmem:[%s303 + $0x1b0] sm:$0xff]
      %v365 = vld [vmem:[%s303 + $0x1b8] sm:$0xff]
      %v366 = vld [vmem:[%s303 + $0x1c0] sm:$0xff]
      %v367 = vld [vmem:[%s303 + $0x1c8] sm:$0xff]
      %v368 = vld [vmem:[%s303 + $0x1d0] sm:$0xff]
      %v369 = vld [vmem:[%s303 + $0x1d8] sm:$0xff]
      %v370 = vld [vmem:[%s303 + $0x1e0] sm:$0xff]
      %v371 = vld [vmem:[%s303 + $0x1e8] sm:$0xff]
      %v372 = vld [vmem:[%s303 + $0x1f0] sm:$0xff]
      %v373 = vld [vmem:[%s303 + $0x1f8] sm:$0xff]
      %v374 = vld [vmem:[%s303 + $0x200] sm:$0xff]
      %v375 = vld [vmem:[%s303 + $0x208] sm:$0xff]
      %v376 = vld [vmem:[%s303 + $0x210] sm:$0xff]
      %v377 = vld [vmem:[%s303 + $0x218] sm:$0xff]
      %v378 = vld [vmem:[%s303 + $0x220] sm:$0xff]
      %v379 = vld [vmem:[%s303 + $0x228] sm:$0xff]
      %v380 = vld [vmem:[%s303 + $0x230] sm:$0xff]
      %v381 = vld [vmem:[%s303 + $0x238] sm:$0xff]
      %v382 = vld [vmem:[%s303 + $0x240] sm:$0xff]
      %v383 = vld [vmem:[%s303 + $0x248] sm:$0xff]
      %v384 = vld [vmem:[%s303 + $0x250] sm:$0xff]
      %v385 = vld [vmem:[%s303 + $0x258] sm:$0xff]
      %v386 = vld [vmem:[%s303 + $0x260] sm:$0xff]
      %v387 = vld [vmem:[%s303 + $0x268] sm:$0xff]
      %v388 = vld [vmem:[%s303 + $0x270] sm:$0xff]
      %v389 = vld [vmem:[%s303 + $0x278] sm:$0xff]
      %v390 = vld [vmem:[%s303 + $0x280] sm:$0xff]
      %v391 = vld [vmem:[%s303 + $0x288] sm:$0xff]
      %v392 = vld [vmem:[%s303 + $0x290] sm:$0xff]
      %v393 = vld [vmem:[%s303 + $0x298] sm:$0xff]
      %v394 = vld [vmem:[%s303 + $0x2a0] sm:$0xff]
      %v395 = vld [vmem:[%s303 + $0x2a8] sm:$0xff]
      %v396 = vld [vmem:[%s303 + $0x2b0] sm:$0xff]
      %v397 = vld [vmem:[%s303 + $0x2b8] sm:$0xff]
      %v398 = vld [vmem:[%s303 + $0x2c0] sm:$0xff]
      %v399 = vld [vmem:[%s303 + $0x2c8] sm:$0xff]
      %v400 = vld [vmem:[%s303 + $0x2d0] sm:$0xff]
      %v401 = vld [vmem:[%s303 + $0x2d8] sm:$0xff]
      %v402 = vld [vmem:[%s303 + $0x2e0] sm:$0xff]
      %v403 = vld [vmem:[%s303 + $0x2e8] sm:$0xff]
      %v404 = vld [vmem:[%s303 + $0x2f0] sm:$0xff]
      %v405 = vld [vmem:[%s303 + $0x2f8] sm:$0xff]
      %v406 = vld [vmem:[%s303 + $0x300] sm:$0xff]
      %v407 = vld [vmem:[%s303 + $0x308] sm:$0xff]
      %v408 = vld [vmem:[%s303 + $0x310] sm:$0xff]
      %v409 = vld [vmem:[%s303 + $0x318] sm:$0xff]
      %v410 = vld [vmem:[%s303 + $0x320] sm:$0xff]
      %v411 = vld [vmem:[%s303 + $0x328] sm:$0xff]
      %v412 = vld [vmem:[%s303 + $0x330] sm:$0xff]
      %v413 = vld [vmem:[%s303 + $0x338] sm:$0xff]
      %v414 = vld [vmem:[%s303 + $0x340] sm:$0xff]
      %v415 = vld [vmem:[%s303 + $0x348] sm:$0xff]
      %v416 = vld [vmem:[%s303 + $0x350] sm:$0xff]
      %v417 = vld [vmem:[%s303 + $0x358] sm:$0xff]
      %v418 = vld [vmem:[%s303 + $0x360] sm:$0xff]
      %v419 = vld [vmem:[%s303 + $0x368] sm:$0xff]
      %v420 = vld [vmem:[%s303 + $0x370] sm:$0xff]
      %v421 = vld [vmem:[%s303 + $0x378] sm:$0xff]
      %v422 = vld [vmem:[%s303 + $0x380] sm:$0xff]
      %v423 = vld [vmem:[%s303 + $0x388] sm:$0xff]
      %v424 = vld [vmem:[%s303 + $0x390] sm:$0xff]
      %v425 = vld [vmem:[%s303 + $0x398] sm:$0xff]
      %v426 = vld [vmem:[%s303 + $0x3a0] sm:$0xff]
      %v427 = vld [vmem:[%s303 + $0x3a8] sm:$0xff]
      %v428 = vld [vmem:[%s303 + $0x3b0] sm:$0xff]
      %v429 = vld [vmem:[%s303 + $0x3b8] sm:$0xff]
      %v430 = vld [vmem:[%s303 + $0x3c0] sm:$0xff]
      %v431 = vld [vmem:[%s303 + $0x3c8] sm:$0xff]
      %v432 = vld [vmem:[%s303 + $0x3d0] sm:$0xff]
      %v433 = vld [vmem:[%s303 + $0x3d8] sm:$0xff]
      %v434 = vld [vmem:[%s303 + $0x3e0] sm:$0xff]
      %v435 = vld [vmem:[%s303 + $0x3e8] sm:$0xff]
      %v436 = vld [vmem:[%s303 + $0x3f0] sm:$0xff]
      %v437 = vld [vmem:[%s303 + $0x3f8] sm:$0xff]
      %v438 = vld [vmem:[%s303 + $0x400] sm:$0xff]
      %v439 = vld [vmem:[%s303 + $0x408] sm:$0xff]
      %v440 = vld [vmem:[%s303 + $0x410] sm:$0xff]
      %v441 = vld [vmem:[%s303 + $0x418] sm:$0xff]
      %v442 = vld [vmem:[%s303 + $0x420] sm:$0xff]
      %v443 = vld [vmem:[%s303 + $0x428] sm:$0xff]
      %v444 = vld [vmem:[%s303 + $0x430] sm:$0xff]
      %v445 = vld [vmem:[%s303 + $0x438] sm:$0xff]
      %v446 = vld [vmem:[%s303 + $0x440] sm:$0xff]
      %v447 = vld [vmem:[%s303 + $0x448] sm:$0xff]
      %v448 = vld [vmem:[%s303 + $0x450] sm:$0xff]
      %v449 = vld [vmem:[%s303 + $0x458] sm:$0xff]
      %v450 = vld [vmem:[%s303 + $0x460] sm:$0xff]
      %v451 = vld [vmem:[%s303 + $0x468] sm:$0xff]
      %v452 = vld [vmem:[%s303 + $0x470] sm:$0xff]
      %v453 = vld [vmem:[%s303 + $0x478] sm:$0xff]
      %v454 = vld [vmem:[%s303 + $0x480] sm:$0xff]
      %v455 = vld [vmem:[%s303 + $0x488] sm:$0xff]
      %v456 = vld [vmem:[%s303 + $0x490] sm:$0xff]
      %v457 = vld [vmem:[%s303 + $0x498] sm:$0xff]
      %v458 = vld [vmem:[%s303 + $0x4a0] sm:$0xff]
      %v459 = vld [vmem:[%s303 + $0x4a8] sm:$0xff]
      %v460 = vld [vmem:[%s303 + $0x4b0] sm:$0xff]
      %v461 = vld [vmem:[%s303 + $0x4b8] sm:$0xff]
      %v462 = vld [vmem:[%s303 + $0x4c0] sm:$0xff]
      %v463 = vld [vmem:[%s303 + $0x4c8] sm:$0xff]
      %v464 = vld [vmem:[%s303 + $0x4d0] sm:$0xff]
      %v465 = vld [vmem:[%s303 + $0x4d8] sm:$0xff]
      %v466 = vld [vmem:[%s303 + $0x4e0] sm:$0xff]
      %v467 = vld [vmem:[%s303 + $0x4e8] sm:$0xff]
      %v468 = vld [vmem:[%s303 + $0x4f0] sm:$0xff]
      %v469 = vld [vmem:[%s303 + $0x4f8] sm:$0xff]
      %v470 = vld [vmem:[%s303 + $0x500] sm:$0xff]
      %v471 = vld [vmem:[%s303 + $0x508] sm:$0xff]
      %v472 = vld [vmem:[%s303 + $0x510] sm:$0xff]
      %v473 = vld [vmem:[%s303 + $0x518] sm:$0xff]
      %v474 = vld [vmem:[%s303 + $0x520] sm:$0xff]
      %v475 = vld [vmem:[%s303 + $0x528] sm:$0xff]
      %v476 = vld [vmem:[%s303 + $0x530] sm:$0xff]
      %v477 = vld [vmem:[%s303 + $0x538] sm:$0xff]
      %v478 = vld [vmem:[%s303 + $0x540] sm:$0xff]
      %v479 = vld [vmem:[%s303 + $0x548] sm:$0xff]
      %v480 = vld [vmem:[%s303 + $0x550] sm:$0xff]
      %v481 = vld [vmem:[%s303 + $0x558] sm:$0xff]
      %v482 = vld [vmem:[%s303 + $0x560] sm:$0xff]
      %v483 = vld [vmem:[%s303 + $0x568] sm:$0xff]
      %v484 = vld [vmem:[%s303 + $0x570] sm:$0xff]
      %v485 = vld [vmem:[%s303 + $0x578] sm:$0xff]
      %v486 = vld [vmem:[%s303 + $0x580] sm:$0xff]
      %v487 = vld [vmem:[%s303 + $0x588] sm:$0xff]
      %v488 = vld [vmem:[%s303 + $0x590] sm:$0xff]
      %v489 = vld [vmem:[%s303 + $0x598] sm:$0xff]
      %v490 = vld [vmem:[%s303 + $0x5a0] sm:$0xff]
      %v491 = vld [vmem:[%s303 + $0x5a8] sm:$0xff]
      %v492 = vld [vmem:[%s303 + $0x5b0] sm:$0xff]
      %v493 = vld [vmem:[%s303 + $0x5b8] sm:$0xff]
      %v494 = vld [vmem:[%s303 + $0x5c0] sm:$0xff]
      %v495 = vld [vmem:[%s303 + $0x5c8] sm:$0xff]
      %v496 = vld [vmem:[%s303 + $0x5d0] sm:$0xff]
      %v497 = vld [vmem:[%s303 + $0x5d8] sm:$0xff]
      %v498 = vld [vmem:[%s303 + $0x5e0] sm:$0xff]
      %v499 = vld [vmem:[%s303 + $0x5e8] sm:$0xff]
      %v500 = vld [vmem:[%s303 + $0x5f0] sm:$0xff]
      %v501 = vld [vmem:[%s303 + $0x5f8] sm:$0xff]
      %v502 = vld [vmem:[%s303 + $0x600] sm:$0xff]
      %v503 = vld [vmem:[%s303 + $0x608] sm:$0xff]
      %v504 = vld [vmem:[%s303 + $0x610] sm:$0xff]
      %v505 = vld [vmem:[%s303 + $0x618] sm:$0xff]
      %v506 = vld [vmem:[%s303 + $0x620] sm:$0xff]
      %v507 = vld [vmem:[%s303 + $0x628] sm:$0xff]
      %v508 = vld [vmem:[%s303 + $0x630] sm:$0xff]
      %v509 = vld [vmem:[%s303 + $0x638] sm:$0xff]
      %v510 = vld [vmem:[%s303 + $0x640] sm:$0xff]
      %v511 = vld [vmem:[%s303 + $0x648] sm:$0xff]
      %v512 = vld [vmem:[%s303 + $0x650] sm:$0xff]
      %v513 = vld [vmem:[%s303 + $0x658] sm:$0xff]
      %v514 = vld [vmem:[%s303 + $0x660] sm:$0xff]
      %v515 = vld [vmem:[%s303 + $0x668] sm:$0xff]
      %v516 = vld [vmem:[%s303 + $0x670] sm:$0xff]
      %v517 = vld [vmem:[%s303 + $0x678] sm:$0xff]
      %v518 = vld [vmem:[%s303 + $0x680] sm:$0xff]
      %v519 = vld [vmem:[%s303 + $0x688] sm:$0xff]
      %v520 = vld [vmem:[%s303 + $0x690] sm:$0xff]
      %v521 = vld [vmem:[%s303 + $0x698] sm:$0xff]
      %v522 = vld [vmem:[%s303 + $0x6a0] sm:$0xff]
      %v523 = vld [vmem:[%s303 + $0x6a8] sm:$0xff]
      %v524 = vld [vmem:[%s303 + $0x6b0] sm:$0xff]
      %v525 = vld [vmem:[%s303 + $0x6b8] sm:$0xff]
      %v526 = vld [vmem:[%s303 + $0x6c0] sm:$0xff]
      %v527 = vld [vmem:[%s303 + $0x6c8] sm:$0xff]
      %v528 = vld [vmem:[%s303 + $0x6d0] sm:$0xff]
      %v529 = vld [vmem:[%s303 + $0x6d8] sm:$0xff]
      %v530 = vld [vmem:[%s303 + $0x6e0] sm:$0xff]
      %v531 = vld [vmem:[%s303 + $0x6e8] sm:$0xff]
      %v532 = vld [vmem:[%s303 + $0x6f0] sm:$0xff]
      %v533 = vld [vmem:[%s303 + $0x6f8] sm:$0xff]
      %v534 = vld [vmem:[%s303 + $0x700] sm:$0xff]
      %v535 = vld [vmem:[%s303 + $0x708] sm:$0xff]
      %v536 = vld [vmem:[%s303 + $0x710] sm:$0xff]
      %v537 = vld [vmem:[%s303 + $0x718] sm:$0xff]
      %v538 = vld [vmem:[%s303 + $0x720] sm:$0xff]
      %v539 = vld [vmem:[%s303 + $0x728] sm:$0xff]
      %v540 = vld [vmem:[%s303 + $0x730] sm:$0xff]
      %v541 = vld [vmem:[%s303 + $0x738] sm:$0xff]
      %v542 = vld [vmem:[%s303 + $0x740] sm:$0xff]
      %v543 = vld [vmem:[%s303 + $0x748] sm:$0xff]
      %v544 = vld [vmem:[%s303 + $0x750] sm:$0xff]
      %v545 = vld [vmem:[%s303 + $0x758] sm:$0xff]
      %v546 = vld [vmem:[%s303 + $0x760] sm:$0xff]
      %v547 = vld [vmem:[%s303 + $0x768] sm:$0xff]
      %v548 = vld [vmem:[%s303 + $0x770] sm:$0xff]
      %v549 = vld [vmem:[%s303 + $0x778] sm:$0xff]
      %v550 = vld [vmem:[%s303 + $0x780] sm:$0xff]
      %v551 = vld [vmem:[%s303 + $0x788] sm:$0xff]
      %v552 = vld [vmem:[%s303 + $0x790] sm:$0xff]
      %v553 = vld [vmem:[%s303 + $0x798] sm:$0xff]
      %v554 = vld [vmem:[%s303 + $0x7a0] sm:$0xff]
      %v555 = vld [vmem:[%s303 + $0x7a8] sm:$0xff]
      %v556 = vld [vmem:[%s303 + $0x7b0] sm:$0xff]
      %v557 = vld [vmem:[%s303 + $0x7b8] sm:$0xff]
      %v558 = vld [vmem:[%s303 + $0x7c0] sm:$0xff]
      %v559 = vld [vmem:[%s303 + $0x7c8] sm:$0xff]
      %v560 = vld [vmem:[%s303 + $0x7d0] sm:$0xff]
      %v561 = vld [vmem:[%s303 + $0x7d8] sm:$0xff]
      %v562 = vld [vmem:[%s303 + $0x7e0] sm:$0xff]
      %v563 = vld [vmem:[%s303 + $0x7e8] sm:$0xff]
      %v564 = vld [vmem:[%s303 + $0x7f0] sm:$0xff]
      %v565 = vld [vmem:[%s303 + $0x7f8] sm:$0xff]
      %v566 = vadd.f32 %v310, %v311
      %v567 = vadd.f32 %v566, %v312
      %v568 = vadd.f32 %v567, %v313
      %569 = vadd.xlane.f32.xlu0 %v568
      %v570 = vpop.xlane.xlu0 %569
      %v571 = vadd.f32 %v314, %v315
      %v572 = vadd.f32 %v571, %v316
      %v573 = vadd.f32 %v572, %v317
      %574 = vadd.xlane.f32.xlu0 %v573
      %v575 = vpop.xlane.xlu0 %574
      %v576 = vadd.f32 %v318, %v319
      %v577 = vadd.f32 %v576, %v320
      %v578 = vadd.f32 %v577, %v321
      %579 = vadd.xlane.f32.xlu0 %v578
      %v580 = vpop.xlane.xlu0 %579
      %v581 = vadd.f32 %v322, %v323
      %v582 = vadd.f32 %v581, %v324
      %v583 = vadd.f32 %v582, %v325
      %584 = vadd.xlane.f32.xlu0 %v583
      %v585 = vpop.xlane.xlu0 %584
      %v586 = vadd.f32 %v326, %v327
      %v587 = vadd.f32 %v586, %v328
      %v588 = vadd.f32 %v587, %v329
      %589 = vadd.xlane.f32.xlu0 %v588
      %v590 = vpop.xlane.xlu0 %589
      %v591 = vadd.f32 %v330, %v331
      %v592 = vadd.f32 %v591, %v332
      %v593 = vadd.f32 %v592, %v333
      %594 = vadd.xlane.f32.xlu0 %v593
      %v595 = vpop.xlane.xlu0 %594
      %v596 = vadd.f32 %v334, %v335
      %v597 = vadd.f32 %v596, %v336
      %v598 = vadd.f32 %v597, %v337
      %599 = vadd.xlane.f32.xlu0 %v598
      %v600 = vpop.xlane.xlu0 %599
      %v601 = vadd.f32 %v338, %v339
      %v602 = vadd.f32 %v601, %v340
      %v603 = vadd.f32 %v602, %v341
      %604 = vadd.xlane.f32.xlu0 %v603
      %v605 = vpop.xlane.xlu0 %604
      %v606 = vadd.f32 %v342, %v343
      %v607 = vadd.f32 %v606, %v344
      %v608 = vadd.f32 %v607, %v345
      %609 = vadd.xlane.f32.xlu0 %v608
      %v610 = vpop.xlane.xlu0 %609
      %v611 = vadd.f32 %v346, %v347
      %v612 = vadd.f32 %v611, %v348
      %v613 = vadd.f32 %v612, %v349
      %614 = vadd.xlane.f32.xlu0 %v613
      %v615 = vpop.xlane.xlu0 %614
      %v616 = vadd.f32 %v350, %v351
      %v617 = vadd.f32 %v616, %v352
      %v618 = vadd.f32 %v617, %v353
      %619 = vadd.xlane.f32.xlu0 %v618
      %v620 = vpop.xlane.xlu0 %619
      %v621 = vadd.f32 %v354, %v355
      %v622 = vadd.f32 %v621, %v356
      %v623 = vadd.f32 %v622, %v357
      %624 = vadd.xlane.f32.xlu0 %v623
      %v625 = vpop.xlane.xlu0 %624
      %v626 = vadd.f32 %v358, %v359
      %v627 = vadd.f32 %v626, %v360
      %v628 = vadd.f32 %v627, %v361
      %629 = vadd.xlane.f32.xlu0 %v628
      %v630 = vpop.xlane.xlu0 %629
      %v631 = vadd.f32 %v362, %v363
      %v632 = vadd.f32 %v631, %v364
      %v633 = vadd.f32 %v632, %v365
      %634 = vadd.xlane.f32.xlu0 %v633
      %v635 = vpop.xlane.xlu0 %634
      %v636 = vadd.f32 %v366, %v367
      %v637 = vadd.f32 %v636, %v368
      %v638 = vadd.f32 %v637, %v369
      %639 = vadd.xlane.f32.xlu0 %v638
      %v640 = vpop.xlane.xlu0 %639
      %v641 = vadd.f32 %v370, %v371
      %v642 = vadd.f32 %v641, %v372
      %v643 = vadd.f32 %v642, %v373
      %644 = vadd.xlane.f32.xlu0 %v643
      %v645 = vpop.xlane.xlu0 %644
      %v646 = vadd.f32 %v374, %v375
      %v647 = vadd.f32 %v646, %v376
      %v648 = vadd.f32 %v647, %v377
      %649 = vadd.xlane.f32.xlu0 %v648
      %v650 = vpop.xlane.xlu0 %649
      %v651 = vadd.f32 %v378, %v379
      %v652 = vadd.f32 %v651, %v380
      %v653 = vadd.f32 %v652, %v381
      %654 = vadd.xlane.f32.xlu0 %v653
      %v655 = vpop.xlane.xlu0 %654
      %v656 = vadd.f32 %v382, %v383
      %v657 = vadd.f32 %v656, %v384
      %v658 = vadd.f32 %v657, %v385
      %659 = vadd.xlane.f32.xlu0 %v658
      %v660 = vpop.xlane.xlu0 %659
      %v661 = vadd.f32 %v386, %v387
      %v662 = vadd.f32 %v661, %v388
      %v663 = vadd.f32 %v662, %v389
      %664 = vadd.xlane.f32.xlu0 %v663
      %v665 = vpop.xlane.xlu0 %664
      %v666 = vadd.f32 %v390, %v391
      %v667 = vadd.f32 %v666, %v392
      %v668 = vadd.f32 %v667, %v393
      %669 = vadd.xlane.f32.xlu0 %v668
      %v670 = vpop.xlane.xlu0 %669
      %v671 = vadd.f32 %v394, %v395
      %v672 = vadd.f32 %v671, %v396
      %v673 = vadd.f32 %v672, %v397
      %674 = vadd.xlane.f32.xlu0 %v673
      %v675 = vpop.xlane.xlu0 %674
      %v676 = vadd.f32 %v398, %v399
      %v677 = vadd.f32 %v676, %v400
      %v678 = vadd.f32 %v677, %v401
      %679 = vadd.xlane.f32.xlu0 %v678
      %v680 = vpop.xlane.xlu0 %679
      %v681 = vadd.f32 %v402, %v403
      %v682 = vadd.f32 %v681, %v404
      %v683 = vadd.f32 %v682, %v405
      %684 = vadd.xlane.f32.xlu0 %v683
      %v685 = vpop.xlane.xlu0 %684
      %v686 = vadd.f32 %v406, %v407
      %v687 = vadd.f32 %v686, %v408
      %v688 = vadd.f32 %v687, %v409
      %689 = vadd.xlane.f32.xlu0 %v688
      %v690 = vpop.xlane.xlu0 %689
      %v691 = vadd.f32 %v410, %v411
      %v692 = vadd.f32 %v691, %v412
      %v693 = vadd.f32 %v692, %v413
      %694 = vadd.xlane.f32.xlu0 %v693
      %v695 = vpop.xlane.xlu0 %694
      %v696 = vadd.f32 %v414, %v415
      %v697 = vadd.f32 %v696, %v416
      %v698 = vadd.f32 %v697, %v417
      %699 = vadd.xlane.f32.xlu0 %v698
      %v700 = vpop.xlane.xlu0 %699
      %v701 = vadd.f32 %v418, %v419
      %v702 = vadd.f32 %v701, %v420
      %v703 = vadd.f32 %v702, %v421
      %704 = vadd.xlane.f32.xlu0 %v703
      %v705 = vpop.xlane.xlu0 %704
      %v706 = vadd.f32 %v422, %v423
      %v707 = vadd.f32 %v706, %v424
      %v708 = vadd.f32 %v707, %v425
      %709 = vadd.xlane.f32.xlu0 %v708
      %v710 = vpop.xlane.xlu0 %709
      %v711 = vadd.f32 %v426, %v427
      %v712 = vadd.f32 %v711, %v428
      %v713 = vadd.f32 %v712, %v429
      %714 = vadd.xlane.f32.xlu0 %v713
      %v715 = vpop.xlane.xlu0 %714
      %v716 = vadd.f32 %v430, %v431
      %v717 = vadd.f32 %v716, %v432
      %v718 = vadd.f32 %v717, %v433
      %719 = vadd.xlane.f32.xlu0 %v718
      %v720 = vpop.xlane.xlu0 %719
      %v721 = vadd.f32 %v434, %v435
      %v722 = vadd.f32 %v721, %v436
      %v723 = vadd.f32 %v722, %v437
      %724 = vadd.xlane.f32.xlu0 %v723
      %v725 = vpop.xlane.xlu0 %724
      %v726 = vadd.f32 %v438, %v439
      %v727 = vadd.f32 %v726, %v440
      %v728 = vadd.f32 %v727, %v441
      %729 = vadd.xlane.f32.xlu0 %v728
      %v730 = vpop.xlane.xlu0 %729
      %v731 = vadd.f32 %v442, %v443
      %v732 = vadd.f32 %v731, %v444
      %v733 = vadd.f32 %v732, %v445
      %734 = vadd.xlane.f32.xlu0 %v733
      %v735 = vpop.xlane.xlu0 %734
      %v736 = vadd.f32 %v446, %v447
      %v737 = vadd.f32 %v736, %v448
      %v738 = vadd.f32 %v737, %v449
      %739 = vadd.xlane.f32.xlu0 %v738
      %v740 = vpop.xlane.xlu0 %739
      %v741 = vadd.f32 %v450, %v451
      %v742 = vadd.f32 %v741, %v452
      %v743 = vadd.f32 %v742, %v453
      %744 = vadd.xlane.f32.xlu0 %v743
      %v745 = vpop.xlane.xlu0 %744
      %v746 = vadd.f32 %v454, %v455
      %v747 = vadd.f32 %v746, %v456
      %v748 = vadd.f32 %v747, %v457
      %749 = vadd.xlane.f32.xlu0 %v748
      %v750 = vpop.xlane.xlu0 %749
      %v751 = vadd.f32 %v458, %v459
      %v752 = vadd.f32 %v751, %v460
      %v753 = vadd.f32 %v752, %v461
      %754 = vadd.xlane.f32.xlu0 %v753
      %v755 = vpop.xlane.xlu0 %754
      %v756 = vadd.f32 %v462, %v463
      %v757 = vadd.f32 %v756, %v464
      %v758 = vadd.f32 %v757, %v465
      %759 = vadd.xlane.f32.xlu0 %v758
      %v760 = vpop.xlane.xlu0 %759
      %v761 = vadd.f32 %v466, %v467
      %v762 = vadd.f32 %v761, %v468
      %v763 = vadd.f32 %v762, %v469
      %764 = vadd.xlane.f32.xlu0 %v763
      %v765 = vpop.xlane.xlu0 %764
      %v766 = vadd.f32 %v470, %v471
      %v767 = vadd.f32 %v766, %v472
      %v768 = vadd.f32 %v767, %v473
      %769 = vadd.xlane.f32.xlu0 %v768
      %v770 = vpop.xlane.xlu0 %769
      %v771 = vadd.f32 %v474, %v475
      %v772 = vadd.f32 %v771, %v476
      %v773 = vadd.f32 %v772, %v477
      %774 = vadd.xlane.f32.xlu0 %v773
      %v775 = vpop.xlane.xlu0 %774
      %v776 = vadd.f32 %v478, %v479
      %v777 = vadd.f32 %v776, %v480
      %v778 = vadd.f32 %v777, %v481
      %779 = vadd.xlane.f32.xlu0 %v778
      %v780 = vpop.xlane.xlu0 %779
      %v781 = vadd.f32 %v482, %v483
      %v782 = vadd.f32 %v781, %v484
      %v783 = vadd.f32 %v782, %v485
      %784 = vadd.xlane.f32.xlu0 %v783
      %v785 = vpop.xlane.xlu0 %784
      %v786 = vadd.f32 %v486, %v487
      %v787 = vadd.f32 %v786, %v488
      %v788 = vadd.f32 %v787, %v489
      %789 = vadd.xlane.f32.xlu0 %v788
      %v790 = vpop.xlane.xlu0 %789
      %v791 = vadd.f32 %v490, %v491
      %v792 = vadd.f32 %v791, %v492
      %v793 = vadd.f32 %v792, %v493
      %794 = vadd.xlane.f32.xlu0 %v793
      %v795 = vpop.xlane.xlu0 %794
      %v796 = vadd.f32 %v494, %v495
      %v797 = vadd.f32 %v796, %v496
      %v798 = vadd.f32 %v797, %v497
      %799 = vadd.xlane.f32.xlu0 %v798
      %v800 = vpop.xlane.xlu0 %799
      %v801 = vadd.f32 %v498, %v499
      %v802 = vadd.f32 %v801, %v500
      %v803 = vadd.f32 %v802, %v501
      %804 = vadd.xlane.f32.xlu0 %v803
      %v805 = vpop.xlane.xlu0 %804
      %v806 = vadd.f32 %v502, %v503
      %v807 = vadd.f32 %v806, %v504
      %v808 = vadd.f32 %v807, %v505
      %809 = vadd.xlane.f32.xlu0 %v808
      %v810 = vpop.xlane.xlu0 %809
      %v811 = vadd.f32 %v506, %v507
      %v812 = vadd.f32 %v811, %v508
      %v813 = vadd.f32 %v812, %v509
      %814 = vadd.xlane.f32.xlu0 %v813
      %v815 = vpop.xlane.xlu0 %814
      %v816 = vadd.f32 %v510, %v511
      %v817 = vadd.f32 %v816, %v512
      %v818 = vadd.f32 %v817, %v513
      %819 = vadd.xlane.f32.xlu0 %v818
      %v820 = vpop.xlane.xlu0 %819
      %v821 = vadd.f32 %v514, %v515
      %v822 = vadd.f32 %v821, %v516
      %v823 = vadd.f32 %v822, %v517
      %824 = vadd.xlane.f32.xlu0 %v823
      %v825 = vpop.xlane.xlu0 %824
      %v826 = vadd.f32 %v518, %v519
      %v827 = vadd.f32 %v826, %v520
      %v828 = vadd.f32 %v827, %v521
      %829 = vadd.xlane.f32.xlu0 %v828
      %v830 = vpop.xlane.xlu0 %829
      %v831 = vadd.f32 %v522, %v523
      %v832 = vadd.f32 %v831, %v524
      %v833 = vadd.f32 %v832, %v525
      %834 = vadd.xlane.f32.xlu0 %v833
      %v835 = vpop.xlane.xlu0 %834
      %v836 = vadd.f32 %v526, %v527
      %v837 = vadd.f32 %v836, %v528
      %v838 = vadd.f32 %v837, %v529
      %839 = vadd.xlane.f32.xlu0 %v838
      %v840 = vpop.xlane.xlu0 %839
      %v841 = vadd.f32 %v530, %v531
      %v842 = vadd.f32 %v841, %v532
      %v843 = vadd.f32 %v842, %v533
      %844 = vadd.xlane.f32.xlu0 %v843
      %v845 = vpop.xlane.xlu0 %844
      %v846 = vadd.f32 %v534, %v535
      %v847 = vadd.f32 %v846, %v536
      %v848 = vadd.f32 %v847, %v537
      %849 = vadd.xlane.f32.xlu0 %v848
      %v850 = vpop.xlane.xlu0 %849
      %v851 = vadd.f32 %v538, %v539
      %v852 = vadd.f32 %v851, %v540
      %v853 = vadd.f32 %v852, %v541
      %854 = vadd.xlane.f32.xlu0 %v853
      %v855 = vpop.xlane.xlu0 %854
      %v856 = vadd.f32 %v542, %v543
      %v857 = vadd.f32 %v856, %v544
      %v858 = vadd.f32 %v857, %v545
      %859 = vadd.xlane.f32.xlu0 %v858
      %v860 = vpop.xlane.xlu0 %859
      %v861 = vadd.f32 %v546, %v547
      %v862 = vadd.f32 %v861, %v548
      %v863 = vadd.f32 %v862, %v549
      %864 = vadd.xlane.f32.xlu0 %v863
      %v865 = vpop.xlane.xlu0 %864
      %v866 = vadd.f32 %v550, %v551
      %v867 = vadd.f32 %v866, %v552
      %v868 = vadd.f32 %v867, %v553
      %869 = vadd.xlane.f32.xlu0 %v868
      %v870 = vpop.xlane.xlu0 %869
      %v871 = vadd.f32 %v554, %v555
      %v872 = vadd.f32 %v871, %v556
      %v873 = vadd.f32 %v872, %v557
      %874 = vadd.xlane.f32.xlu0 %v873
      %v875 = vpop.xlane.xlu0 %874
      %v876 = vadd.f32 %v558, %v559
      %v877 = vadd.f32 %v876, %v560
      %v878 = vadd.f32 %v877, %v561
      %879 = vadd.xlane.f32.xlu0 %v878
      %v880 = vpop.xlane.xlu0 %879
      %v881 = vadd.f32 %v562, %v563
      %v882 = vadd.f32 %v881, %v564
      %v883 = vadd.f32 %v882, %v565
      %884 = vadd.xlane.f32.xlu0 %v883
      %v885 = vpop.xlane.xlu0 %884
      %v886 = vmax.f32 %v310, %v311
      %v887 = vmax.f32 %v886, %v312
      %v888 = vmax.f32 %v887, %v313
      %889 = vmax.xlane.f32.xlu0 %v888
      %v890 = vpop.xlane.xlu0 %889
      %v891 = vmax.f32 %v314, %v315
      %v892 = vmax.f32 %v891, %v316
      %v893 = vmax.f32 %v892, %v317
      %894 = vmax.xlane.f32.xlu0 %v893
      %v895 = vpop.xlane.xlu0 %894
      %v896 = vmax.f32 %v318, %v319
      %v897 = vmax.f32 %v896, %v320
      %v898 = vmax.f32 %v897, %v321
      %899 = vmax.xlane.f32.xlu0 %v898
      %v900 = vpop.xlane.xlu0 %899
      %v901 = vmax.f32 %v322, %v323
      %v902 = vmax.f32 %v901, %v324
      %v903 = vmax.f32 %v902, %v325
      %904 = vmax.xlane.f32.xlu0 %v903
      %v905 = vpop.xlane.xlu0 %904
      %v906 = vmax.f32 %v326, %v327
      %v907 = vmax.f32 %v906, %v328
      %v908 = vmax.f32 %v907, %v329
      %909 = vmax.xlane.f32.xlu0 %v908
      %v910 = vpop.xlane.xlu0 %909
      %v911 = vmax.f32 %v330, %v331
      %v912 = vmax.f32 %v911, %v332
      %v913 = vmax.f32 %v912, %v333
      %914 = vmax.xlane.f32.xlu0 %v913
      %v915 = vpop.xlane.xlu0 %914
      %v916 = vmax.f32 %v334, %v335
      %v917 = vmax.f32 %v916, %v336
      %v918 = vmax.f32 %v917, %v337
      %919 = vmax.xlane.f32.xlu0 %v918
      %v920 = vpop.xlane.xlu0 %919
      %v921 = vmax.f32 %v338, %v339
      %v922 = vmax.f32 %v921, %v340
      %v923 = vmax.f32 %v922, %v341
      %924 = vmax.xlane.f32.xlu0 %v923
      %v925 = vpop.xlane.xlu0 %924
      %v926 = vmax.f32 %v342, %v343
      %v927 = vmax.f32 %v926, %v344
      %v928 = vmax.f32 %v927, %v345
      %929 = vmax.xlane.f32.xlu0 %v928
      %v930 = vpop.xlane.xlu0 %929
      %v931 = vmax.f32 %v346, %v347
      %v932 = vmax.f32 %v931, %v348
      %v933 = vmax.f32 %v932, %v349
      %934 = vmax.xlane.f32.xlu0 %v933
      %v935 = vpop.xlane.xlu0 %934
      %v936 = vmax.f32 %v350, %v351
      %v937 = vmax.f32 %v936, %v352
      %v938 = vmax.f32 %v937, %v353
      %939 = vmax.xlane.f32.xlu0 %v938
      %v940 = vpop.xlane.xlu0 %939
      %v941 = vmax.f32 %v354, %v355
      %v942 = vmax.f32 %v941, %v356
      %v943 = vmax.f32 %v942, %v357
      %944 = vmax.xlane.f32.xlu0 %v943
      %v945 = vpop.xlane.xlu0 %944
      %v946 = vmax.f32 %v358, %v359
      %v947 = vmax.f32 %v946, %v360
      %v948 = vmax.f32 %v947, %v361
      %949 = vmax.xlane.f32.xlu0 %v948
      %v950 = vpop.xlane.xlu0 %949
      %v951 = vmax.f32 %v362, %v363
      %v952 = vmax.f32 %v951, %v364
      %v953 = vmax.f32 %v952, %v365
      %954 = vmax.xlane.f32.xlu0 %v953
      %v955 = vpop.xlane.xlu0 %954
      %v956 = vmax.f32 %v366, %v367
      %v957 = vmax.f32 %v956, %v368
      %v958 = vmax.f32 %v957, %v369
      %959 = vmax.xlane.f32.xlu0 %v958
      %v960 = vpop.xlane.xlu0 %959
      %v961 = vmax.f32 %v370, %v371
      %v962 = vmax.f32 %v961, %v372
      %v963 = vmax.f32 %v962, %v373
      %964 = vmax.xlane.f32.xlu0 %v963
      %v965 = vpop.xlane.xlu0 %964
      %v966 = vmax.f32 %v374, %v375
      %v967 = vmax.f32 %v966, %v376
      %v968 = vmax.f32 %v967, %v377
      %969 = vmax.xlane.f32.xlu0 %v968
      %v970 = vpop.xlane.xlu0 %969
      %v971 = vmax.f32 %v378, %v379
      %v972 = vmax.f32 %v971, %v380
      %v973 = vmax.f32 %v972, %v381
      %974 = vmax.xlane.f32.xlu0 %v973
      %v975 = vpop.xlane.xlu0 %974
      %v976 = vmax.f32 %v382, %v383
      %v977 = vmax.f32 %v976, %v384
      %v978 = vmax.f32 %v977, %v385
      %979 = vmax.xlane.f32.xlu0 %v978
      %v980 = vpop.xlane.xlu0 %979
      %v981 = vmax.f32 %v386, %v387
      %v982 = vmax.f32 %v981, %v388
      %v983 = vmax.f32 %v982, %v389
      %984 = vmax.xlane.f32.xlu0 %v983
      %v985 = vpop.xlane.xlu0 %984
      %v986 = vmax.f32 %v390, %v391
      %v987 = vmax.f32 %v986, %v392
      %v988 = vmax.f32 %v987, %v393
      %989 = vmax.xlane.f32.xlu0 %v988
      %v990 = vpop.xlane.xlu0 %989
      %v991 = vmax.f32 %v394, %v395
      %v992 = vmax.f32 %v991, %v396
      %v993 = vmax.f32 %v992, %v397
      %994 = vmax.xlane.f32.xlu0 %v993
      %v995 = vpop.xlane.xlu0 %994
      %v996 = vmax.f32 %v398, %v399
      %v997 = vmax.f32 %v996, %v400
      %v998 = vmax.f32 %v997, %v401
      %999 = vmax.xlane.f32.xlu0 %v998
      %v1000 = vpop.xlane.xlu0 %999
      %v1001 = vmax.f32 %v402, %v403
      %v1002 = vmax.f32 %v1001, %v404
      %v1003 = vmax.f32 %v1002, %v405
      %1004 = vmax.xlane.f32.xlu0 %v1003
      %v1005 = vpop.xlane.xlu0 %1004
      %v1006 = vmax.f32 %v406, %v407
      %v1007 = vmax.f32 %v1006, %v408
      %v1008 = vmax.f32 %v1007, %v409
      %1009 = vmax.xlane.f32.xlu0 %v1008
      %v1010 = vpop.xlane.xlu0 %1009
      %v1011 = vmax.f32 %v410, %v411
      %v1012 = vmax.f32 %v1011, %v412
      %v1013 = vmax.f32 %v1012, %v413
      %1014 = vmax.xlane.f32.xlu0 %v1013
      %v1015 = vpop.xlane.xlu0 %1014
      %v1016 = vmax.f32 %v414, %v415
      %v1017 = vmax.f32 %v1016, %v416
      %v1018 = vmax.f32 %v1017, %v417
      %1019 = vmax.xlane.f32.xlu0 %v1018
      %v1020 = vpop.xlane.xlu0 %1019
      %v1021 = vmax.f32 %v418, %v419
      %v1022 = vmax.f32 %v1021, %v420
      %v1023 = vmax.f32 %v1022, %v421
      %1024 = vmax.xlane.f32.xlu0 %v1023
      %v1025 = vpop.xlane.xlu0 %1024
      %v1026 = vmax.f32 %v422, %v423
      %v1027 = vmax.f32 %v1026, %v424
      %v1028 = vmax.f32 %v1027, %v425
      %1029 = vmax.xlane.f32.xlu0 %v1028
      %v1030 = vpop.xlane.xlu0 %1029
      %v1031 = vmax.f32 %v426, %v427
      %v1032 = vmax.f32 %v1031, %v428
      %v1033 = vmax.f32 %v1032, %v429
      %1034 = vmax.xlane.f32.xlu0 %v1033
      %v1035 = vpop.xlane.xlu0 %1034
      %v1036 = vmax.f32 %v430, %v431
      %v1037 = vmax.f32 %v1036, %v432
      %v1038 = vmax.f32 %v1037, %v433
      %1039 = vmax.xlane.f32.xlu0 %v1038
      %v1040 = vpop.xlane.xlu0 %1039
      %v1041 = vmax.f32 %v434, %v435
      %v1042 = vmax.f32 %v1041, %v436
      %v1043 = vmax.f32 %v1042, %v437
      %1044 = vmax.xlane.f32.xlu0 %v1043
      %v1045 = vpop.xlane.xlu0 %1044
      %v1046 = vmax.f32 %v438, %v439
      %v1047 = vmax.f32 %v1046, %v440
      %v1048 = vmax.f32 %v1047, %v441
      %1049 = vmax.xlane.f32.xlu0 %v1048
      %v1050 = vpop.xlane.xlu0 %1049
      %v1051 = vmax.f32 %v442, %v443
      %v1052 = vmax.f32 %v1051, %v444
      %v1053 = vmax.f32 %v1052, %v445
      %1054 = vmax.xlane.f32.xlu0 %v1053
      %v1055 = vpop.xlane.xlu0 %1054
      %v1056 = vmax.f32 %v446, %v447
      %v1057 = vmax.f32 %v1056, %v448
      %v1058 = vmax.f32 %v1057, %v449
      %1059 = vmax.xlane.f32.xlu0 %v1058
      %v1060 = vpop.xlane.xlu0 %1059
      %v1061 = vmax.f32 %v450, %v451
      %v1062 = vmax.f32 %v1061, %v452
      %v1063 = vmax.f32 %v1062, %v453
      %1064 = vmax.xlane.f32.xlu0 %v1063
      %v1065 = vpop.xlane.xlu0 %1064
      %v1066 = vmax.f32 %v454, %v455
      %v1067 = vmax.f32 %v1066, %v456
      %v1068 = vmax.f32 %v1067, %v457
      %1069 = vmax.xlane.f32.xlu0 %v1068
      %v1070 = vpop.xlane.xlu0 %1069
      %v1071 = vmax.f32 %v458, %v459
      %v1072 = vmax.f32 %v1071, %v460
      %v1073 = vmax.f32 %v1072, %v461
      %1074 = vmax.xlane.f32.xlu0 %v1073
      %v1075 = vpop.xlane.xlu0 %1074
      %v1076 = vmax.f32 %v462, %v463
      %v1077 = vmax.f32 %v1076, %v464
      %v1078 = vmax.f32 %v1077, %v465
      %1079 = vmax.xlane.f32.xlu0 %v1078
      %v1080 = vpop.xlane.xlu0 %1079
      %v1081 = vmax.f32 %v466, %v467
      %v1082 = vmax.f32 %v1081, %v468
      %v1083 = vmax.f32 %v1082, %v469
      %1084 = vmax.xlane.f32.xlu0 %v1083
      %v1085 = vpop.xlane.xlu0 %1084
      %v1086 = vmax.f32 %v470, %v471
      %v1087 = vmax.f32 %v1086, %v472
      %v1088 = vmax.f32 %v1087, %v473
      %1089 = vmax.xlane.f32.xlu0 %v1088
      %v1090 = vpop.xlane.xlu0 %1089
      %v1091 = vmax.f32 %v474, %v475
      %v1092 = vmax.f32 %v1091, %v476
      %v1093 = vmax.f32 %v1092, %v477
      %1094 = vmax.xlane.f32.xlu0 %v1093
      %v1095 = vpop.xlane.xlu0 %1094
      %v1096 = vmax.f32 %v478, %v479
      %v1097 = vmax.f32 %v1096, %v480
      %v1098 = vmax.f32 %v1097, %v481
      %1099 = vmax.xlane.f32.xlu0 %v1098
      %v1100 = vpop.xlane.xlu0 %1099
      %v1101 = vmax.f32 %v482, %v483
      %v1102 = vmax.f32 %v1101, %v484
      %v1103 = vmax.f32 %v1102, %v485
      %1104 = vmax.xlane.f32.xlu0 %v1103
      %v1105 = vpop.xlane.xlu0 %1104
      %v1106 = vmax.f32 %v486, %v487
      %v1107 = vmax.f32 %v1106, %v488
      %v1108 = vmax.f32 %v1107, %v489
      %1109 = vmax.xlane.f32.xlu0 %v1108
      %v1110 = vpop.xlane.xlu0 %1109
      %v1111 = vmax.f32 %v490, %v491
      %v1112 = vmax.f32 %v1111, %v492
      %v1113 = vmax.f32 %v1112, %v493
      %1114 = vmax.xlane.f32.xlu0 %v1113
      %v1115 = vpop.xlane.xlu0 %1114
      %v1116 = vmax.f32 %v494, %v495
      %v1117 = vmax.f32 %v1116, %v496
      %v1118 = vmax.f32 %v1117, %v497
      %1119 = vmax.xlane.f32.xlu0 %v1118
      %v1120 = vpop.xlane.xlu0 %1119
      %v1121 = vmax.f32 %v498, %v499
      %v1122 = vmax.f32 %v1121, %v500
      %v1123 = vmax.f32 %v1122, %v501
      %1124 = vmax.xlane.f32.xlu0 %v1123
      %v1125 = vpop.xlane.xlu0 %1124
      %v1126 = vmax.f32 %v502, %v503
      %v1127 = vmax.f32 %v1126, %v504
      %v1128 = vmax.f32 %v1127, %v505
      %1129 = vmax.xlane.f32.xlu0 %v1128
      %v1130 = vpop.xlane.xlu0 %1129
      %v1131 = vmax.f32 %v506, %v507
      %v1132 = vmax.f32 %v1131, %v508
      %v1133 = vmax.f32 %v1132, %v509
      %1134 = vmax.xlane.f32.xlu0 %v1133
      %v1135 = vpop.xlane.xlu0 %1134
      %v1136 = vmax.f32 %v510, %v511
      %v1137 = vmax.f32 %v1136, %v512
      %v1138 = vmax.f32 %v1137, %v513
      %1139 = vmax.xlane.f32.xlu0 %v1138
      %v1140 = vpop.xlane.xlu0 %1139
      %v1141 = vmax.f32 %v514, %v515
      %v1142 = vmax.f32 %v1141, %v516
      %v1143 = vmax.f32 %v1142, %v517
      %1144 = vmax.xlane.f32.xlu0 %v1143
      %v1145 = vpop.xlane.xlu0 %1144
      %v1146 = vmax.f32 %v518, %v519
      %v1147 = vmax.f32 %v1146, %v520
      %v1148 = vmax.f32 %v1147, %v521
      %1149 = vmax.xlane.f32.xlu0 %v1148
      %v1150 = vpop.xlane.xlu0 %1149
      %v1151 = vmax.f32 %v522, %v523
      %v1152 = vmax.f32 %v1151, %v524
      %v1153 = vmax.f32 %v1152, %v525
      %1154 = vmax.xlane.f32.xlu0 %v1153
      %v1155 = vpop.xlane.xlu0 %1154
      %v1156 = vmax.f32 %v526, %v527
      %v1157 = vmax.f32 %v1156, %v528
      %v1158 = vmax.f32 %v1157, %v529
      %1159 = vmax.xlane.f32.xlu0 %v1158
      %v1160 = vpop.xlane.xlu0 %1159
      %v1161 = vmax.f32 %v530, %v531
      %v1162 = vmax.f32 %v1161, %v532
      %v1163 = vmax.f32 %v1162, %v533
      %1164 = vmax.xlane.f32.xlu0 %v1163
      %v1165 = vpop.xlane.xlu0 %1164
      %v1166 = vmax.f32 %v534, %v535
      %v1167 = vmax.f32 %v1166, %v536
      %v1168 = vmax.f32 %v1167, %v537
      %1169 = vmax.xlane.f32.xlu0 %v1168
      %v1170 = vpop.xlane.xlu0 %1169
      %v1171 = vmax.f32 %v538, %v539
      %v1172 = vmax.f32 %v1171, %v540
      %v1173 = vmax.f32 %v1172, %v541
      %1174 = vmax.xlane.f32.xlu0 %v1173
      %v1175 = vpop.xlane.xlu0 %1174
      %v1176 = vmax.f32 %v542, %v543
      %v1177 = vmax.f32 %v1176, %v544
      %v1178 = vmax.f32 %v1177, %v545
      %1179 = vmax.xlane.f32.xlu0 %v1178
      %v1180 = vpop.xlane.xlu0 %1179
      %v1181 = vmax.f32 %v546, %v547
      %v1182 = vmax.f32 %v1181, %v548
      %v1183 = vmax.f32 %v1182, %v549
      %1184 = vmax.xlane.f32.xlu0 %v1183
      %v1185 = vpop.xlane.xlu0 %1184
      %v1186 = vmax.f32 %v550, %v551
      %v1187 = vmax.f32 %v1186, %v552
      %v1188 = vmax.f32 %v1187, %v553
      %1189 = vmax.xlane.f32.xlu0 %v1188
      %v1190 = vpop.xlane.xlu0 %1189
      %v1191 = vmax.f32 %v554, %v555
      %v1192 = vmax.f32 %v1191, %v556
      %v1193 = vmax.f32 %v1192, %v557
      %1194 = vmax.xlane.f32.xlu0 %v1193
      %v1195 = vpop.xlane.xlu0 %1194
      %v1196 = vmax.f32 %v558, %v559
      %v1197 = vmax.f32 %v1196, %v560
      %v1198 = vmax.f32 %v1197, %v561
      %1199 = vmax.xlane.f32.xlu0 %v1198
      %v1200 = vpop.xlane.xlu0 %1199
      %v1201 = vmax.f32 %v562, %v563
      %v1202 = vmax.f32 %v1201, %v564
      %v1203 = vmax.f32 %v1202, %v565
      %1204 = vmax.xlane.f32.xlu0 %v1203
      %v1205 = vpop.xlane.xlu0 %1204
      %v1206 = vld [vmem:[%s1] sm:$0xff]
      %v1207 = vld [vmem:[%s1 + $0x8] sm:$0xff]
      %v1208 = vld [vmem:[%s1 + $0x10] sm:$0xff]
      %v1209 = vld [vmem:[%s1 + $0x18] sm:$0xff]
      %v1210 = vld [vmem:[%s1 + $0x20] sm:$0xff]
      %v1211 = vld [vmem:[%s1 + $0x28] sm:$0xff]
      %v1212 = vld [vmem:[%s1 + $0x30] sm:$0xff]
      %v1213 = vld [vmem:[%s1 + $0x38] sm:$0xff]
      %v1214 = vld [vmem:[%s1 + $0x40] sm:$0xff]
      %v1215 = vld [vmem:[%s1 + $0x48] sm:$0xff]
      %v1216 = vld [vmem:[%s1 + $0x50] sm:$0xff]
      %v1217 = vld [vmem:[%s1 + $0x58] sm:$0xff]
      %v1218 = vld [vmem:[%s1 + $0x60] sm:$0xff]
      %v1219 = vld [vmem:[%s1 + $0x68] sm:$0xff]
      %v1220 = vld [vmem:[%s1 + $0x70] sm:$0xff]
      %v1221 = vld [vmem:[%s1 + $0x78] sm:$0xff]
      %v1222 = vld [vmem:[%s1 + $0x80] sm:$0xff]
      %v1223 = vld [vmem:[%s1 + $0x88] sm:$0xff]
      %v1224 = vld [vmem:[%s1 + $0x90] sm:$0xff]
      %v1225 = vld [vmem:[%s1 + $0x98] sm:$0xff]
      %v1226 = vld [vmem:[%s1 + $0xa0] sm:$0xff]
      %v1227 = vld [vmem:[%s1 + $0xa8] sm:$0xff]
      %v1228 = vld [vmem:[%s1 + $0xb0] sm:$0xff]
      %v1229 = vld [vmem:[%s1 + $0xb8] sm:$0xff]
      %v1230 = vld [vmem:[%s1 + $0xc0] sm:$0xff]
      %v1231 = vld [vmem:[%s1 + $0xc8] sm:$0xff]
      %v1232 = vld [vmem:[%s1 + $0xd0] sm:$0xff]
      %v1233 = vld [vmem:[%s1 + $0xd8] sm:$0xff]
      %v1234 = vld [vmem:[%s1 + $0xe0] sm:$0xff]
      %v1235 = vld [vmem:[%s1 + $0xe8] sm:$0xff]
      %v1236 = vld [vmem:[%s1 + $0xf0] sm:$0xff]
      %v1237 = vld [vmem:[%s1 + $0xf8] sm:$0xff]
      %v1238 = vld [vmem:[%s2] sm:$0xff]
      %v1239 = vld [vmem:[%s2 + $0x8] sm:$0xff]
      %v1240 = vld [vmem:[%s2 + $0x10] sm:$0xff]
      %v1241 = vld [vmem:[%s2 + $0x18] sm:$0xff]
      %v1242 = vld [vmem:[%s2 + $0x20] sm:$0xff]
      %v1243 = vld [vmem:[%s2 + $0x28] sm:$0xff]
      %v1244 = vld [vmem:[%s2 + $0x30] sm:$0xff]
      %v1245 = vld [vmem:[%s2 + $0x38] sm:$0xff]
      %v1246 = vld [vmem:[%s2 + $0x40] sm:$0xff]
      %v1247 = vld [vmem:[%s2 + $0x48] sm:$0xff]
      %v1248 = vld [vmem:[%s2 + $0x50] sm:$0xff]
      %v1249 = vld [vmem:[%s2 + $0x58] sm:$0xff]
      %v1250 = vld [vmem:[%s2 + $0x60] sm:$0xff]
      %v1251 = vld [vmem:[%s2 + $0x68] sm:$0xff]
      %v1252 = vld [vmem:[%s2 + $0x70] sm:$0xff]
      %v1253 = vld [vmem:[%s2 + $0x78] sm:$0xff]
      %v1254 = vld [vmem:[%s2 + $0x80] sm:$0xff]
      %v1255 = vld [vmem:[%s2 + $0x88] sm:$0xff]
      %v1256 = vld [vmem:[%s2 + $0x90] sm:$0xff]
      %v1257 = vld [vmem:[%s2 + $0x98] sm:$0xff]
      %v1258 = vld [vmem:[%s2 + $0xa0] sm:$0xff]
      %v1259 = vld [vmem:[%s2 + $0xa8] sm:$0xff]
      %v1260 = vld [vmem:[%s2 + $0xb0] sm:$0xff]
      %v1261 = vld [vmem:[%s2 + $0xb8] sm:$0xff]
      %v1262 = vld [vmem:[%s2 + $0xc0] sm:$0xff]
      %v1263 = vld [vmem:[%s2 + $0xc8] sm:$0xff]
      %v1264 = vld [vmem:[%s2 + $0xd0] sm:$0xff]
      %v1265 = vld [vmem:[%s2 + $0xd8] sm:$0xff]
      %v1266 = vld [vmem:[%s2 + $0xe0] sm:$0xff]
      %v1267 = vld [vmem:[%s2 + $0xe8] sm:$0xff]
      %v1268 = vld [vmem:[%s2 + $0xf0] sm:$0xff]
      %v1269 = vld [vmem:[%s2 + $0xf8] sm:$0xff]
      %v1334 = vlaneseq
      %v1335 = vand.u32 %v1334, 127
      %v1336 = vlaneseq
      %v1337 = vshrl.u32 %v1336, 7
      %v1338 = vsub.s32 %v1335, %v1337
      %v1339 = vrot.slane %v890, %v1338
      %v1340 = vadd.s32 %v1335, 4294967288
      %v1341 = vlaneseq
      %v1342 = vshrl.u32 %v1341, 7
      %v1343 = vsub.s32 %v1340, %v1342
      %v1344 = vrot.slane %v895, %v1343
      %vm1345 = vcmask 130112
      %v1346 = vsel %vm1345, %v1344, %v1339
      %v1347 = vadd.s32 %v1335, 4294967280
      %v1348 = vlaneseq
      %v1349 = vshrl.u32 %v1348, 7
      %v1350 = vsub.s32 %v1347, %v1349
      %v1351 = vrot.slane %v900, %v1350
      %vm1352 = vcmask 195712
      %v1353 = vsel %vm1352, %v1351, %v1346
      %v1354 = vadd.s32 %v1335, 4294967272
      %v1355 = vlaneseq
      %v1356 = vshrl.u32 %v1355, 7
      %v1357 = vsub.s32 %v1354, %v1356
      %v1358 = vrot.slane %v905, %v1357
      %vm1359 = vcmask 261312
      %v1360 = vsel %vm1359, %v1358, %v1353
      %v1361 = vadd.s32 %v1335, 4294967264
      %v1362 = vlaneseq
      %v1363 = vshrl.u32 %v1362, 7
      %v1364 = vsub.s32 %v1361, %v1363
      %v1365 = vrot.slane %v910, %v1364
      %vm1366 = vcmask 326912
      %v1367 = vsel %vm1366, %v1365, %v1360
      %v1368 = vadd.s32 %v1335, 4294967256
      %v1369 = vlaneseq
      %v1370 = vshrl.u32 %v1369, 7
      %v1371 = vsub.s32 %v1368, %v1370
      %v1372 = vrot.slane %v915, %v1371
      %vm1373 = vcmask 392512
      %v1374 = vsel %vm1373, %v1372, %v1367
      %v1375 = vadd.s32 %v1335, 4294967248
      %v1376 = vlaneseq
      %v1377 = vshrl.u32 %v1376, 7
      %v1378 = vsub.s32 %v1375, %v1377
      %v1379 = vrot.slane %v920, %v1378
      %vm1380 = vcmask 458112
      %v1381 = vsel %vm1380, %v1379, %v1374
      %v1382 = vadd.s32 %v1335, 4294967240
      %v1383 = vlaneseq
      %v1384 = vshrl.u32 %v1383, 7
      %v1385 = vsub.s32 %v1382, %v1384
      %v1386 = vrot.slane %v925, %v1385
      %vm1387 = vcmask 523712
      %v1388 = vsel %vm1387, %v1386, %v1381
      %v1389 = vadd.s32 %v1335, 4294967232
      %v1390 = vlaneseq
      %v1391 = vshrl.u32 %v1390, 7
      %v1392 = vsub.s32 %v1389, %v1391
      %v1393 = vrot.slane %v930, %v1392
      %vm1394 = vcmask 589312
      %v1395 = vsel %vm1394, %v1393, %v1388
      %v1396 = vadd.s32 %v1335, 4294967224
      %v1397 = vlaneseq
      %v1398 = vshrl.u32 %v1397, 7
      %v1399 = vsub.s32 %v1396, %v1398
      %v1400 = vrot.slane %v935, %v1399
      %vm1401 = vcmask 654912
      %v1402 = vsel %vm1401, %v1400, %v1395
      %v1403 = vadd.s32 %v1335, 4294967216
      %v1404 = vlaneseq
      %v1405 = vshrl.u32 %v1404, 7
      %v1406 = vsub.s32 %v1403, %v1405
      %v1407 = vrot.slane %v940, %v1406
      %vm1408 = vcmask 720512
      %v1409 = vsel %vm1408, %v1407, %v1402
      %v1410 = vadd.s32 %v1335, 4294967208
      %v1411 = vlaneseq
      %v1412 = vshrl.u32 %v1411, 7
      %v1413 = vsub.s32 %v1410, %v1412
      %v1414 = vrot.slane %v945, %v1413
      %vm1415 = vcmask 786112
      %v1416 = vsel %vm1415, %v1414, %v1409
      %v1417 = vadd.s32 %v1335, 4294967200
      %v1418 = vlaneseq
      %v1419 = vshrl.u32 %v1418, 7
      %v1420 = vsub.s32 %v1417, %v1419
      %v1421 = vrot.slane %v950, %v1420
      %vm1422 = vcmask 851712
      %v1423 = vsel %vm1422, %v1421, %v1416
      %v1424 = vadd.s32 %v1335, 4294967192
      %v1425 = vlaneseq
      %v1426 = vshrl.u32 %v1425, 7
      %v1427 = vsub.s32 %v1424, %v1426
      %v1428 = vrot.slane %v955, %v1427
      %vm1429 = vcmask 917312
      %v1430 = vsel %vm1429, %v1428, %v1423
      %v1431 = vadd.s32 %v1335, 4294967184
      %v1432 = vlaneseq
      %v1433 = vshrl.u32 %v1432, 7
      %v1434 = vsub.s32 %v1431, %v1433
      %v1435 = vrot.slane %v960, %v1434
      %vm1436 = vcmask 982912
      %v1437 = vsel %vm1436, %v1435, %v1430
      %v1438 = vadd.s32 %v1335, 4294967176
      %v1439 = vlaneseq
      %v1440 = vshrl.u32 %v1439, 7
      %v1441 = vsub.s32 %v1438, %v1440
      %v1442 = vrot.slane %v965, %v1441
      %vm1443 = vcmask 1048512
      %v1444 = vsel %vm1443, %v1442, %v1437
      %v1445 = vlaneseq
      %v1446 = vshrl.u32 %v1445, 7
      %v1447 = vsub.s32 %v1335, %v1446
      %v1448 = vrot.slane %v970, %v1447
      %v1449 = vlaneseq
      %v1450 = vshrl.u32 %v1449, 7
      %v1451 = vsub.s32 %v1340, %v1450
      %v1452 = vrot.slane %v975, %v1451
      %v1453 = vsel %vm1345, %v1452, %v1448
      %v1454 = vlaneseq
      %v1455 = vshrl.u32 %v1454, 7
      %v1456 = vsub.s32 %v1347, %v1455
      %v1457 = vrot.slane %v980, %v1456
      %v1458 = vsel %vm1352, %v1457, %v1453
      %v1459 = vlaneseq
      %v1460 = vshrl.u32 %v1459, 7
      %v1461 = vsub.s32 %v1354, %v1460
      %v1462 = vrot.slane %v985, %v1461
      %v1463 = vsel %vm1359, %v1462, %v1458
      %v1464 = vlaneseq
      %v1465 = vshrl.u32 %v1464, 7
      %v1466 = vsub.s32 %v1361, %v1465
      %v1467 = vrot.slane %v990, %v1466
      %v1468 = vsel %vm1366, %v1467, %v1463
      %v1469 = vlaneseq
      %v1470 = vshrl.u32 %v1469, 7
      %v1471 = vsub.s32 %v1368, %v1470
      %v1472 = vrot.slane %v995, %v1471
      %v1473 = vsel %vm1373, %v1472, %v1468
      %v1474 = vlaneseq
      %v1475 = vshrl.u32 %v1474, 7
      %v1476 = vsub.s32 %v1375, %v1475
      %v1477 = vrot.slane %v1000, %v1476
      %v1478 = vsel %vm1380, %v1477, %v1473
      %v1479 = vlaneseq
      %v1480 = vshrl.u32 %v1479, 7
      %v1481 = vsub.s32 %v1382, %v1480
      %v1482 = vrot.slane %v1005, %v1481
      %v1483 = vsel %vm1387, %v1482, %v1478
      %v1484 = vlaneseq
      %v1485 = vshrl.u32 %v1484, 7
      %v1486 = vsub.s32 %v1389, %v1485
      %v1487 = vrot.slane %v1010, %v1486
      %v1488 = vsel %vm1394, %v1487, %v1483
      %v1489 = vlaneseq
      %v1490 = vshrl.u32 %v1489, 7
      %v1491 = vsub.s32 %v1396, %v1490
      %v1492 = vrot.slane %v1015, %v1491
      %v1493 = vsel %vm1401, %v1492, %v1488
      %v1494 = vlaneseq
      %v1495 = vshrl.u32 %v1494, 7
      %v1496 = vsub.s32 %v1403, %v1495
      %v1497 = vrot.slane %v1020, %v1496
      %v1498 = vsel %vm1408, %v1497, %v1493
      %v1499 = vlaneseq
      %v1500 = vshrl.u32 %v1499, 7
      %v1501 = vsub.s32 %v1410, %v1500
      %v1502 = vrot.slane %v1025, %v1501
      %v1503 = vsel %vm1415, %v1502, %v1498
      %v1504 = vlaneseq
      %v1505 = vshrl.u32 %v1504, 7
      %v1506 = vsub.s32 %v1417, %v1505
      %v1507 = vrot.slane %v1030, %v1506
      %v1508 = vsel %vm1422, %v1507, %v1503
      %v1509 = vlaneseq
      %v1510 = vshrl.u32 %v1509, 7
      %v1511 = vsub.s32 %v1424, %v1510
      %v1512 = vrot.slane %v1035, %v1511
      %v1513 = vsel %vm1429, %v1512, %v1508
      %v1514 = vlaneseq
      %v1515 = vshrl.u32 %v1514, 7
      %v1516 = vsub.s32 %v1431, %v1515
      %v1517 = vrot.slane %v1040, %v1516
      %v1518 = vsel %vm1436, %v1517, %v1513
      %v1519 = vlaneseq
      %v1520 = vshrl.u32 %v1519, 7
      %v1521 = vsub.s32 %v1438, %v1520
      %v1522 = vrot.slane %v1045, %v1521
      %v1523 = vsel %vm1443, %v1522, %v1518
      %v1524 = vlaneseq
      %v1525 = vshrl.u32 %v1524, 7
      %v1526 = vsub.s32 %v1335, %v1525
      %v1527 = vrot.slane %v1050, %v1526
      %v1528 = vlaneseq
      %v1529 = vshrl.u32 %v1528, 7
      %v1530 = vsub.s32 %v1340, %v1529
      %v1531 = vrot.slane %v1055, %v1530
      %v1532 = vsel %vm1345, %v1531, %v1527
      %v1533 = vlaneseq
      %v1534 = vshrl.u32 %v1533, 7
      %v1535 = vsub.s32 %v1347, %v1534
      %v1536 = vrot.slane %v1060, %v1535
      %v1537 = vsel %vm1352, %v1536, %v1532
      %v1538 = vlaneseq
      %v1539 = vshrl.u32 %v1538, 7
      %v1540 = vsub.s32 %v1354, %v1539
      %v1541 = vrot.slane %v1065, %v1540
      %v1542 = vsel %vm1359, %v1541, %v1537
      %v1543 = vlaneseq
      %v1544 = vshrl.u32 %v1543, 7
      %v1545 = vsub.s32 %v1361, %v1544
      %v1546 = vrot.slane %v1070, %v1545
      %v1547 = vsel %vm1366, %v1546, %v1542
      %v1548 = vlaneseq
      %v1549 = vshrl.u32 %v1548, 7
      %v1550 = vsub.s32 %v1368, %v1549
      %v1551 = vrot.slane %v1075, %v1550
      %v1552 = vsel %vm1373, %v1551, %v1547
      %v1553 = vlaneseq
      %v1554 = vshrl.u32 %v1553, 7
      %v1555 = vsub.s32 %v1375, %v1554
      %v1556 = vrot.slane %v1080, %v1555
      %v1557 = vsel %vm1380, %v1556, %v1552
      %v1558 = vlaneseq
      %v1559 = vshrl.u32 %v1558, 7
      %v1560 = vsub.s32 %v1382, %v1559
      %v1561 = vrot.slane %v1085, %v1560
      %v1562 = vsel %vm1387, %v1561, %v1557
      %v1563 = vlaneseq
      %v1564 = vshrl.u32 %v1563, 7
      %v1565 = vsub.s32 %v1389, %v1564
      %v1566 = vrot.slane %v1090, %v1565
      %v1567 = vsel %vm1394, %v1566, %v1562
      %v1568 = vlaneseq
      %v1569 = vshrl.u32 %v1568, 7
      %v1570 = vsub.s32 %v1396, %v1569
      %v1571 = vrot.slane %v1095, %v1570
      %v1572 = vsel %vm1401, %v1571, %v1567
      %v1573 = vlaneseq
      %v1574 = vshrl.u32 %v1573, 7
      %v1575 = vsub.s32 %v1403, %v1574
      %v1576 = vrot.slane %v1100, %v1575
      %v1577 = vsel %vm1408, %v1576, %v1572
      %v1578 = vlaneseq
      %v1579 = vshrl.u32 %v1578, 7
      %v1580 = vsub.s32 %v1410, %v1579
      %v1581 = vrot.slane %v1105, %v1580
      %v1582 = vsel %vm1415, %v1581, %v1577
      %v1583 = vlaneseq
      %v1584 = vshrl.u32 %v1583, 7
      %v1585 = vsub.s32 %v1417, %v1584
      %v1586 = vrot.slane %v1110, %v1585
      %v1587 = vsel %vm1422, %v1586, %v1582
      %v1588 = vlaneseq
      %v1589 = vshrl.u32 %v1588, 7
      %v1590 = vsub.s32 %v1424, %v1589
      %v1591 = vrot.slane %v1115, %v1590
      %v1592 = vsel %vm1429, %v1591, %v1587
      %v1593 = vlaneseq
      %v1594 = vshrl.u32 %v1593, 7
      %v1595 = vsub.s32 %v1431, %v1594
      %v1596 = vrot.slane %v1120, %v1595
      %v1597 = vsel %vm1436, %v1596, %v1592
      %v1598 = vlaneseq
      %v1599 = vshrl.u32 %v1598, 7
      %v1600 = vsub.s32 %v1438, %v1599
      %v1601 = vrot.slane %v1125, %v1600
      %v1602 = vsel %vm1443, %v1601, %v1597
      %v1603 = vlaneseq
      %v1604 = vshrl.u32 %v1603, 7
      %v1605 = vsub.s32 %v1335, %v1604
      %v1606 = vrot.slane %v1130, %v1605
      %v1607 = vlaneseq
      %v1608 = vshrl.u32 %v1607, 7
      %v1609 = vsub.s32 %v1340, %v1608
      %v1610 = vrot.slane %v1135, %v1609
      %v1611 = vsel %vm1345, %v1610, %v1606
      %v1612 = vlaneseq
      %v1613 = vshrl.u32 %v1612, 7
      %v1614 = vsub.s32 %v1347, %v1613
      %v1615 = vrot.slane %v1140, %v1614
      %v1616 = vsel %vm1352, %v1615, %v1611
      %v1617 = vlaneseq
      %v1618 = vshrl.u32 %v1617, 7
      %v1619 = vsub.s32 %v1354, %v1618
      %v1620 = vrot.slane %v1145, %v1619
      %v1621 = vsel %vm1359, %v1620, %v1616
      %v1622 = vlaneseq
      %v1623 = vshrl.u32 %v1622, 7
      %v1624 = vsub.s32 %v1361, %v1623
      %v1625 = vrot.slane %v1150, %v1624
      %v1626 = vsel %vm1366, %v1625, %v1621
      %v1627 = vlaneseq
      %v1628 = vshrl.u32 %v1627, 7
      %v1629 = vsub.s32 %v1368, %v1628
      %v1630 = vrot.slane %v1155, %v1629
      %v1631 = vsel %vm1373, %v1630, %v1626
      %v1632 = vlaneseq
      %v1633 = vshrl.u32 %v1632, 7
      %v1634 = vsub.s32 %v1375, %v1633
      %v1635 = vrot.slane %v1160, %v1634
      %v1636 = vsel %vm1380, %v1635, %v1631
      %v1637 = vlaneseq
      %v1638 = vshrl.u32 %v1637, 7
      %v1639 = vsub.s32 %v1382, %v1638
      %v1640 = vrot.slane %v1165, %v1639
      %v1641 = vsel %vm1387, %v1640, %v1636
      %v1642 = vlaneseq
      %v1643 = vshrl.u32 %v1642, 7
      %v1644 = vsub.s32 %v1389, %v1643
      %v1645 = vrot.slane %v1170, %v1644
      %v1646 = vsel %vm1394, %v1645, %v1641
      %v1647 = vlaneseq
      %v1648 = vshrl.u32 %v1647, 7
      %v1649 = vsub.s32 %v1396, %v1648
      %v1650 = vrot.slane %v1175, %v1649
      %v1651 = vsel %vm1401, %v1650, %v1646
      %v1652 = vlaneseq
      %v1653 = vshrl.u32 %v1652, 7
      %v1654 = vsub.s32 %v1403, %v1653
      %v1655 = vrot.slane %v1180, %v1654
      %v1656 = vsel %vm1408, %v1655, %v1651
      %v1657 = vlaneseq
      %v1658 = vshrl.u32 %v1657, 7
      %v1659 = vsub.s32 %v1410, %v1658
      %v1660 = vrot.slane %v1185, %v1659
      %v1661 = vsel %vm1415, %v1660, %v1656
      %v1662 = vlaneseq
      %v1663 = vshrl.u32 %v1662, 7
      %v1664 = vsub.s32 %v1417, %v1663
      %v1665 = vrot.slane %v1190, %v1664
      %v1666 = vsel %vm1422, %v1665, %v1661
      %v1667 = vlaneseq
      %v1668 = vshrl.u32 %v1667, 7
      %v1669 = vsub.s32 %v1424, %v1668
      %v1670 = vrot.slane %v1195, %v1669
      %v1671 = vsel %vm1429, %v1670, %v1666
      %v1672 = vlaneseq
      %v1673 = vshrl.u32 %v1672, 7
      %v1674 = vsub.s32 %v1431, %v1673
      %v1675 = vrot.slane %v1200, %v1674
      %v1676 = vsel %vm1436, %v1675, %v1671
      %v1677 = vlaneseq
      %v1678 = vshrl.u32 %v1677, 7
      %v1679 = vsub.s32 %v1438, %v1678
      %v1680 = vrot.slane %v1205, %v1679
      %v1681 = vsel %vm1443, %v1680, %v1676
      %vm1682 = vcmask 1041409
      %v1683 = vsel %vm1682, %v1602, %v1444
      %v1684 = vsel %vm1682, %v1681, %v1523
      %v1719 = vunpack.c.l.b16 %v1238
      %v1720 = vunpack.c.h.b16 %v1238
      %v1721 = vunpack.c.l.b16 %v1239
      %v1722 = vunpack.c.h.b16 %v1239
      %v1723 = vunpack.c.l.b16 %v1240
      %v1724 = vunpack.c.h.b16 %v1240
      %v1725 = vunpack.c.l.b16 %v1241
      %v1726 = vunpack.c.h.b16 %v1241
      %v1727 = vunpack.c.l.b16 %v1242
      %v1728 = vunpack.c.h.b16 %v1242
      %v1729 = vunpack.c.l.b16 %v1243
      %v1730 = vunpack.c.h.b16 %v1243
      %v1731 = vunpack.c.l.b16 %v1244
      %v1732 = vunpack.c.h.b16 %v1244
      %v1733 = vunpack.c.l.b16 %v1245
      %v1734 = vunpack.c.h.b16 %v1245
      %v1735 = vunpack.c.l.b16 %v1246
      %v1736 = vunpack.c.h.b16 %v1246
      %v1737 = vunpack.c.l.b16 %v1247
      %v1738 = vunpack.c.h.b16 %v1247
      %v1739 = vunpack.c.l.b16 %v1248
      %v1740 = vunpack.c.h.b16 %v1248
      %v1741 = vunpack.c.l.b16 %v1249
      %v1742 = vunpack.c.h.b16 %v1249
      %v1743 = vunpack.c.l.b16 %v1250
      %v1744 = vunpack.c.h.b16 %v1250
      %v1745 = vunpack.c.l.b16 %v1251
      %v1746 = vunpack.c.h.b16 %v1251
      %v1747 = vunpack.c.l.b16 %v1252
      %v1748 = vunpack.c.h.b16 %v1252
      %v1749 = vunpack.c.l.b16 %v1253
      %v1750 = vunpack.c.h.b16 %v1253
      %v1751 = vunpack.c.l.b16 %v1254
      %v1752 = vunpack.c.h.b16 %v1254
      %v1753 = vunpack.c.l.b16 %v1255
      %v1754 = vunpack.c.h.b16 %v1255
      %v1755 = vunpack.c.l.b16 %v1256
      %v1756 = vunpack.c.h.b16 %v1256
      %v1757 = vunpack.c.l.b16 %v1257
      %v1758 = vunpack.c.h.b16 %v1257
      %v1759 = vunpack.c.l.b16 %v1258
      %v1760 = vunpack.c.h.b16 %v1258
      %v1761 = vunpack.c.l.b16 %v1259
      %v1762 = vunpack.c.h.b16 %v1259
      %v1763 = vunpack.c.l.b16 %v1260
      %v1764 = vunpack.c.h.b16 %v1260
      %v1765 = vunpack.c.l.b16 %v1261
      %v1766 = vunpack.c.h.b16 %v1261
      %v1767 = vunpack.c.l.b16 %v1262
      %v1768 = vunpack.c.h.b16 %v1262
      %v1769 = vunpack.c.l.b16 %v1263
      %v1770 = vunpack.c.h.b16 %v1263
      %v1771 = vunpack.c.l.b16 %v1264
      %v1772 = vunpack.c.h.b16 %v1264
      %v1773 = vunpack.c.l.b16 %v1265
      %v1774 = vunpack.c.h.b16 %v1265
      %v1775 = vunpack.c.l.b16 %v1266
      %v1776 = vunpack.c.h.b16 %v1266
      %v1777 = vunpack.c.l.b16 %v1267
      %v1778 = vunpack.c.h.b16 %v1267
      %v1779 = vunpack.c.l.b16 %v1268
      %v1780 = vunpack.c.h.b16 %v1268
      %v1781 = vunpack.c.l.b16 %v1269
      %v1782 = vunpack.c.h.b16 %v1269
      %v1783 = vpack.c.b16 %v1721, %v1719
      %v1784 = vpack.c.b16 %v1722, %v1720
      %v1785 = vpack.c.b16 %v1725, %v1723
      %v1786 = vpack.c.b16 %v1726, %v1724
      %v1787 = vpack.c.b16 %v1729, %v1727
      %v1788 = vpack.c.b16 %v1730, %v1728
      %v1789 = vpack.c.b16 %v1733, %v1731
      %v1790 = vpack.c.b16 %v1734, %v1732
      %v1791 = vpack.c.b16 %v1737, %v1735
      %v1792 = vpack.c.b16 %v1738, %v1736
      %v1793 = vpack.c.b16 %v1741, %v1739
      %v1794 = vpack.c.b16 %v1742, %v1740
      %v1795 = vpack.c.b16 %v1745, %v1743
      %v1796 = vpack.c.b16 %v1746, %v1744
      %v1797 = vpack.c.b16 %v1749, %v1747
      %v1798 = vpack.c.b16 %v1750, %v1748
      %v1799 = vpack.c.b16 %v1753, %v1751
      %v1800 = vpack.c.b16 %v1754, %v1752
      %v1801 = vpack.c.b16 %v1757, %v1755
      %v1802 = vpack.c.b16 %v1758, %v1756
      %v1803 = vpack.c.b16 %v1761, %v1759
      %v1804 = vpack.c.b16 %v1762, %v1760
      %v1805 = vpack.c.b16 %v1765, %v1763
      %v1806 = vpack.c.b16 %v1766, %v1764
      %v1807 = vpack.c.b16 %v1769, %v1767
      %v1808 = vpack.c.b16 %v1770, %v1768
      %v1809 = vpack.c.b16 %v1773, %v1771
      %v1810 = vpack.c.b16 %v1774, %v1772
      %v1811 = vpack.c.b16 %v1777, %v1775
      %v1812 = vpack.c.b16 %v1778, %v1776
      %v1813 = vpack.c.b16 %v1781, %v1779
      %v1814 = vpack.c.b16 %v1782, %v1780
      %1847 = vmatprep.subr.bf16.mxu0 %v1784
      %1848 = vmatpush1.bf16.msra.mxu0 %v1783
      %1849 = vmatprep.subr.bf16.mxu0 %v1786
      %1850 = vmatpush1.bf16.msra.mxu0 %v1785
      %1851 = vmatprep.subr.bf16.mxu0 %v1788
      %1852 = vmatpush1.bf16.msra.mxu0 %v1787
      %1853 = vmatprep.subr.bf16.mxu0 %v1790
      %1854 = vmatpush1.bf16.msra.mxu0 %v1789
      %1855 = vmatprep.subr.bf16.mxu0 %v1792
      %1856 = vmatpush1.bf16.msra.mxu0 %v1791
      %1857 = vmatprep.subr.bf16.mxu0 %v1794
      %1858 = vmatpush1.bf16.msra.mxu0 %v1793
      %1859 = vmatprep.subr.bf16.mxu0 %v1796
      %1860 = vmatpush1.bf16.msra.mxu0 %v1795
      %1861 = vmatprep.subr.bf16.mxu0 %v1798
      %1862 = vmatpush1.bf16.msra.mxu0 %v1797
      %1863 = vmatprep.subr.bf16.mxu0 %v1800
      %1864 = vmatpush1.bf16.msra.mxu0 %v1799
      %1865 = vmatprep.subr.bf16.mxu0 %v1802
      %1866 = vmatpush1.bf16.msra.mxu0 %v1801
      %1867 = vmatprep.subr.bf16.mxu0 %v1804
      %1868 = vmatpush1.bf16.msra.mxu0 %v1803
      %1869 = vmatprep.subr.bf16.mxu0 %v1806
      %1870 = vmatpush1.bf16.msra.mxu0 %v1805
      %1871 = vmatprep.subr.bf16.mxu0 %v1808
      %1872 = vmatpush1.bf16.msra.mxu0 %v1807
      %1873 = vmatprep.subr.bf16.mxu0 %v1810
      %1874 = vmatpush1.bf16.msra.mxu0 %v1809
      %1875 = vmatprep.subr.bf16.mxu0 %v1812
      %1876 = vmatpush1.bf16.msra.mxu0 %v1811
      %1877 = vmatprep.subr.bf16.mxu0 %v1814
      %1878 = vmatpush1.bf16.msra.mxu0 %v1813
      %1879 = vmatprep.mubr.f32.mxu0 %v1684
      %1880 = vmatmul.mubr.f32.gmra.mrb[0].mxu0 %v1683
      %v1881 = vpop.f32.mrb[0].mxu0
      %v1882 = vadd.f32 0.0, %v1881
      %v1883 = vpop.f32.mrb[0].mxu0
      %v1884 = vadd.f32 0.0, %v1883
      %1885 = vdwg.mxu0
      %v1950 = vlaneseq
      %v1951 = vshrl.u32 %v1950, 7
      %v1952 = vsub.s32 %v1335, %v1951
      %v1953 = vrot.slane %v570, %v1952
      %v1954 = vlaneseq
      %v1955 = vshrl.u32 %v1954, 7
      %v1956 = vsub.s32 %v1340, %v1955
      %v1957 = vrot.slane %v575, %v1956
      %v1958 = vsel %vm1345, %v1957, %v1953
      %v1959 = vlaneseq
      %v1960 = vshrl.u32 %v1959, 7
      %v1961 = vsub.s32 %v1347, %v1960
      %v1962 = vrot.slane %v580, %v1961
      %v1963 = vsel %vm1352, %v1962, %v1958
      %v1964 = vlaneseq
      %v1965 = vshrl.u32 %v1964, 7
      %v1966 = vsub.s32 %v1354, %v1965
      %v1967 = vrot.slane %v585, %v1966
      %v1968 = vsel %vm1359, %v1967, %v1963
      %v1969 = vlaneseq
      %v1970 = vshrl.u32 %v1969, 7
      %v1971 = vsub.s32 %v1361, %v1970
      %v1972 = vrot.slane %v590, %v1971
      %v1973 = vsel %vm1366, %v1972, %v1968
      %v1974 = vlaneseq
      %v1975 = vshrl.u32 %v1974, 7
      %v1976 = vsub.s32 %v1368, %v1975
      %v1977 = vrot.slane %v595, %v1976
      %v1978 = vsel %vm1373, %v1977, %v1973
      %v1979 = vlaneseq
      %v1980 = vshrl.u32 %v1979, 7
      %v1981 = vsub.s32 %v1375, %v1980
      %v1982 = vrot.slane %v600, %v1981
      %v1983 = vsel %vm1380, %v1982, %v1978
      %v1984 = vlaneseq
      %v1985 = vshrl.u32 %v1984, 7
      %v1986 = vsub.s32 %v1382, %v1985
      %v1987 = vrot.slane %v605, %v1986
      %v1988 = vsel %vm1387, %v1987, %v1983
      %v1989 = vlaneseq
      %v1990 = vshrl.u32 %v1989, 7
      %v1991 = vsub.s32 %v1389, %v1990
      %v1992 = vrot.slane %v610, %v1991
      %v1993 = vsel %vm1394, %v1992, %v1988
      %v1994 = vlaneseq
      %v1995 = vshrl.u32 %v1994, 7
      %v1996 = vsub.s32 %v1396, %v1995
      %v1997 = vrot.slane %v615, %v1996
      %v1998 = vsel %vm1401, %v1997, %v1993
      %v1999 = vlaneseq
      %v2000 = vshrl.u32 %v1999, 7
      %v2001 = vsub.s32 %v1403, %v2000
      %v2002 = vrot.slane %v620, %v2001
      %v2003 = vsel %vm1408, %v2002, %v1998
      %v2004 = vlaneseq
      %v2005 = vshrl.u32 %v2004, 7
      %v2006 = vsub.s32 %v1410, %v2005
      %v2007 = vrot.slane %v625, %v2006
      %v2008 = vsel %vm1415, %v2007, %v2003
      %v2009 = vlaneseq
      %v2010 = vshrl.u32 %v2009, 7
      %v2011 = vsub.s32 %v1417, %v2010
      %v2012 = vrot.slane %v630, %v2011
      %v2013 = vsel %vm1422, %v2012, %v2008
      %v2014 = vlaneseq
      %v2015 = vshrl.u32 %v2014, 7
      %v2016 = vsub.s32 %v1424, %v2015
      %v2017 = vrot.slane %v635, %v2016
      %v2018 = vsel %vm1429, %v2017, %v2013
      %v2019 = vlaneseq
      %v2020 = vshrl.u32 %v2019, 7
      %v2021 = vsub.s32 %v1431, %v2020
      %v2022 = vrot.slane %v640, %v2021
      %v2023 = vsel %vm1436, %v2022, %v2018
      %v2024 = vlaneseq
      %v2025 = vshrl.u32 %v2024, 7
      %v2026 = vsub.s32 %v1438, %v2025
      %v2027 = vrot.slane %v645, %v2026
      %v2028 = vsel %vm1443, %v2027, %v2023
      %v2029 = vlaneseq
      %v2030 = vshrl.u32 %v2029, 7
      %v2031 = vsub.s32 %v1335, %v2030
      %v2032 = vrot.slane %v650, %v2031
      %v2033 = vlaneseq
      %v2034 = vshrl.u32 %v2033, 7
      %v2035 = vsub.s32 %v1340, %v2034
      %v2036 = vrot.slane %v655, %v2035
      %v2037 = vsel %vm1345, %v2036, %v2032
      %v2038 = vlaneseq
      %v2039 = vshrl.u32 %v2038, 7
      %v2040 = vsub.s32 %v1347, %v2039
      %v2041 = vrot.slane %v660, %v2040
      %v2042 = vsel %vm1352, %v2041, %v2037
      %v2043 = vlaneseq
      %v2044 = vshrl.u32 %v2043, 7
      %v2045 = vsub.s32 %v1354, %v2044
      %v2046 = vrot.slane %v665, %v2045
      %v2047 = vsel %vm1359, %v2046, %v2042
      %v2048 = vlaneseq
      %v2049 = vshrl.u32 %v2048, 7
      %v2050 = vsub.s32 %v1361, %v2049
      %v2051 = vrot.slane %v670, %v2050
      %v2052 = vsel %vm1366, %v2051, %v2047
      %v2053 = vlaneseq
      %v2054 = vshrl.u32 %v2053, 7
      %v2055 = vsub.s32 %v1368, %v2054
      %v2056 = vrot.slane %v675, %v2055
      %v2057 = vsel %vm1373, %v2056, %v2052
      %v2058 = vlaneseq
      %v2059 = vshrl.u32 %v2058, 7
      %v2060 = vsub.s32 %v1375, %v2059
      %v2061 = vrot.slane %v680, %v2060
      %v2062 = vsel %vm1380, %v2061, %v2057
      %v2063 = vlaneseq
      %v2064 = vshrl.u32 %v2063, 7
      %v2065 = vsub.s32 %v1382, %v2064
      %v2066 = vrot.slane %v685, %v2065
      %v2067 = vsel %vm1387, %v2066, %v2062
      %v2068 = vlaneseq
      %v2069 = vshrl.u32 %v2068, 7
      %v2070 = vsub.s32 %v1389, %v2069
      %v2071 = vrot.slane %v690, %v2070
      %v2072 = vsel %vm1394, %v2071, %v2067
      %v2073 = vlaneseq
      %v2074 = vshrl.u32 %v2073, 7
      %v2075 = vsub.s32 %v1396, %v2074
      %v2076 = vrot.slane %v695, %v2075
      %v2077 = vsel %vm1401, %v2076, %v2072
      %v2078 = vlaneseq
      %v2079 = vshrl.u32 %v2078, 7
      %v2080 = vsub.s32 %v1403, %v2079
      %v2081 = vrot.slane %v700, %v2080
      %v2082 = vsel %vm1408, %v2081, %v2077
      %v2083 = vlaneseq
      %v2084 = vshrl.u32 %v2083, 7
      %v2085 = vsub.s32 %v1410, %v2084
      %v2086 = vrot.slane %v705, %v2085
      %v2087 = vsel %vm1415, %v2086, %v2082
      %v2088 = vlaneseq
      %v2089 = vshrl.u32 %v2088, 7
      %v2090 = vsub.s32 %v1417, %v2089
      %v2091 = vrot.slane %v710, %v2090
      %v2092 = vsel %vm1422, %v2091, %v2087
      %v2093 = vlaneseq
      %v2094 = vshrl.u32 %v2093, 7
      %v2095 = vsub.s32 %v1424, %v2094
      %v2096 = vrot.slane %v715, %v2095
      %v2097 = vsel %vm1429, %v2096, %v2092
      %v2098 = vlaneseq
      %v2099 = vshrl.u32 %v2098, 7
      %v2100 = vsub.s32 %v1431, %v2099
      %v2101 = vrot.slane %v720, %v2100
      %v2102 = vsel %vm1436, %v2101, %v2097
      %v2103 = vlaneseq
      %v2104 = vshrl.u32 %v2103, 7
      %v2105 = vsub.s32 %v1438, %v2104
      %v2106 = vrot.slane %v725, %v2105
      %v2107 = vsel %vm1443, %v2106, %v2102
      %v2108 = vlaneseq
      %v2109 = vshrl.u32 %v2108, 7
      %v2110 = vsub.s32 %v1335, %v2109
      %v2111 = vrot.slane %v730, %v2110
      %v2112 = vlaneseq
      %v2113 = vshrl.u32 %v2112, 7
      %v2114 = vsub.s32 %v1340, %v2113
      %v2115 = vrot.slane %v735, %v2114
      %v2116 = vsel %vm1345, %v2115, %v2111
      %v2117 = vlaneseq
      %v2118 = vshrl.u32 %v2117, 7
      %v2119 = vsub.s32 %v1347, %v2118
      %v2120 = vrot.slane %v740, %v2119
      %v2121 = vsel %vm1352, %v2120, %v2116
      %v2122 = vlaneseq
      %v2123 = vshrl.u32 %v2122, 7
      %v2124 = vsub.s32 %v1354, %v2123
      %v2125 = vrot.slane %v745, %v2124
      %v2126 = vsel %vm1359, %v2125, %v2121
      %v2127 = vlaneseq
      %v2128 = vshrl.u32 %v2127, 7
      %v2129 = vsub.s32 %v1361, %v2128
      %v2130 = vrot.slane %v750, %v2129
      %v2131 = vsel %vm1366, %v2130, %v2126
      %v2132 = vlaneseq
      %v2133 = vshrl.u32 %v2132, 7
      %v2134 = vsub.s32 %v1368, %v2133
      %v2135 = vrot.slane %v755, %v2134
      %v2136 = vsel %vm1373, %v2135, %v2131
      %v2137 = vlaneseq
      %v2138 = vshrl.u32 %v2137, 7
      %v2139 = vsub.s32 %v1375, %v2138
      %v2140 = vrot.slane %v760, %v2139
      %v2141 = vsel %vm1380, %v2140, %v2136
      %v2142 = vlaneseq
      %v2143 = vshrl.u32 %v2142, 7
      %v2144 = vsub.s32 %v1382, %v2143
      %v2145 = vrot.slane %v765, %v2144
      %v2146 = vsel %vm1387, %v2145, %v2141
      %v2147 = vlaneseq
      %v2148 = vshrl.u32 %v2147, 7
      %v2149 = vsub.s32 %v1389, %v2148
      %v2150 = vrot.slane %v770, %v2149
      %v2151 = vsel %vm1394, %v2150, %v2146
      %v2152 = vlaneseq
      %v2153 = vshrl.u32 %v2152, 7
      %v2154 = vsub.s32 %v1396, %v2153
      %v2155 = vrot.slane %v775, %v2154
      %v2156 = vsel %vm1401, %v2155, %v2151
      %v2157 = vlaneseq
      %v2158 = vshrl.u32 %v2157, 7
      %v2159 = vsub.s32 %v1403, %v2158
      %v2160 = vrot.slane %v780, %v2159
      %v2161 = vsel %vm1408, %v2160, %v2156
      %v2162 = vlaneseq
      %v2163 = vshrl.u32 %v2162, 7
      %v2164 = vsub.s32 %v1410, %v2163
      %v2165 = vrot.slane %v785, %v2164
      %v2166 = vsel %vm1415, %v2165, %v2161
      %v2167 = vlaneseq
      %v2168 = vshrl.u32 %v2167, 7
      %v2169 = vsub.s32 %v1417, %v2168
      %v2170 = vrot.slane %v790, %v2169
      %v2171 = vsel %vm1422, %v2170, %v2166
      %v2172 = vlaneseq
      %v2173 = vshrl.u32 %v2172, 7
      %v2174 = vsub.s32 %v1424, %v2173
      %v2175 = vrot.slane %v795, %v2174
      %v2176 = vsel %vm1429, %v2175, %v2171
      %v2177 = vlaneseq
      %v2178 = vshrl.u32 %v2177, 7
      %v2179 = vsub.s32 %v1431, %v2178
      %v2180 = vrot.slane %v800, %v2179
      %v2181 = vsel %vm1436, %v2180, %v2176
      %v2182 = vlaneseq
      %v2183 = vshrl.u32 %v2182, 7
      %v2184 = vsub.s32 %v1438, %v2183
      %v2185 = vrot.slane %v805, %v2184
      %v2186 = vsel %vm1443, %v2185, %v2181
      %v2187 = vlaneseq
      %v2188 = vshrl.u32 %v2187, 7
      %v2189 = vsub.s32 %v1335, %v2188
      %v2190 = vrot.slane %v810, %v2189
      %v2191 = vlaneseq
      %v2192 = vshrl.u32 %v2191, 7
      %v2193 = vsub.s32 %v1340, %v2192
      %v2194 = vrot.slane %v815, %v2193
      %v2195 = vsel %vm1345, %v2194, %v2190
      %v2196 = vlaneseq
      %v2197 = vshrl.u32 %v2196, 7
      %v2198 = vsub.s32 %v1347, %v2197
      %v2199 = vrot.slane %v820, %v2198
      %v2200 = vsel %vm1352, %v2199, %v2195
      %v2201 = vlaneseq
      %v2202 = vshrl.u32 %v2201, 7
      %v2203 = vsub.s32 %v1354, %v2202
      %v2204 = vrot.slane %v825, %v2203
      %v2205 = vsel %vm1359, %v2204, %v2200
      %v2206 = vlaneseq
      %v2207 = vshrl.u32 %v2206, 7
      %v2208 = vsub.s32 %v1361, %v2207
      %v2209 = vrot.slane %v830, %v2208
      %v2210 = vsel %vm1366, %v2209, %v2205
      %v2211 = vlaneseq
      %v2212 = vshrl.u32 %v2211, 7
      %v2213 = vsub.s32 %v1368, %v2212
      %v2214 = vrot.slane %v835, %v2213
      %v2215 = vsel %vm1373, %v2214, %v2210
      %v2216 = vlaneseq
      %v2217 = vshrl.u32 %v2216, 7
      %v2218 = vsub.s32 %v1375, %v2217
      %v2219 = vrot.slane %v840, %v2218
      %v2220 = vsel %vm1380, %v2219, %v2215
      %v2221 = vlaneseq
      %v2222 = vshrl.u32 %v2221, 7
      %v2223 = vsub.s32 %v1382, %v2222
      %v2224 = vrot.slane %v845, %v2223
      %v2225 = vsel %vm1387, %v2224, %v2220
      %v2226 = vlaneseq
      %v2227 = vshrl.u32 %v2226, 7
      %v2228 = vsub.s32 %v1389, %v2227
      %v2229 = vrot.slane %v850, %v2228
      %v2230 = vsel %vm1394, %v2229, %v2225
      %v2231 = vlaneseq
      %v2232 = vshrl.u32 %v2231, 7
      %v2233 = vsub.s32 %v1396, %v2232
      %v2234 = vrot.slane %v855, %v2233
      %v2235 = vsel %vm1401, %v2234, %v2230
      %v2236 = vlaneseq
      %v2237 = vshrl.u32 %v2236, 7
      %v2238 = vsub.s32 %v1403, %v2237
      %v2239 = vrot.slane %v860, %v2238
      %v2240 = vsel %vm1408, %v2239, %v2235
      %v2241 = vlaneseq
      %v2242 = vshrl.u32 %v2241, 7
      %v2243 = vsub.s32 %v1410, %v2242
      %v2244 = vrot.slane %v865, %v2243
      %v2245 = vsel %vm1415, %v2244, %v2240
      %v2246 = vlaneseq
      %v2247 = vshrl.u32 %v2246, 7
      %v2248 = vsub.s32 %v1417, %v2247
      %v2249 = vrot.slane %v870, %v2248
      %v2250 = vsel %vm1422, %v2249, %v2245
      %v2251 = vlaneseq
      %v2252 = vshrl.u32 %v2251, 7
      %v2253 = vsub.s32 %v1424, %v2252
      %v2254 = vrot.slane %v875, %v2253
      %v2255 = vsel %vm1429, %v2254, %v2250
      %v2256 = vlaneseq
      %v2257 = vshrl.u32 %v2256, 7
      %v2258 = vsub.s32 %v1431, %v2257
      %v2259 = vrot.slane %v880, %v2258
      %v2260 = vsel %vm1436, %v2259, %v2255
      %v2261 = vlaneseq
      %v2262 = vshrl.u32 %v2261, 7
      %v2263 = vsub.s32 %v1438, %v2262
      %v2264 = vrot.slane %v885, %v2263
      %v2265 = vsel %vm1443, %v2264, %v2260
      %v2266 = vsel %vm1682, %v2186, %v2028
      %v2267 = vsel %vm1682, %v2265, %v2107
      %v2302 = vunpack.c.l.b16 %v1206
      %v2303 = vunpack.c.h.b16 %v1206
      %v2304 = vunpack.c.l.b16 %v1207
      %v2305 = vunpack.c.h.b16 %v1207
      %v2306 = vunpack.c.l.b16 %v1208
      %v2307 = vunpack.c.h.b16 %v1208
      %v2308 = vunpack.c.l.b16 %v1209
      %v2309 = vunpack.c.h.b16 %v1209
      %v2310 = vunpack.c.l.b16 %v1210
      %v2311 = vunpack.c.h.b16 %v1210
      %v2312 = vunpack.c.l.b16 %v1211
      %v2313 = vunpack.c.h.b16 %v1211
      %v2314 = vunpack.c.l.b16 %v1212
      %v2315 = vunpack.c.h.b16 %v1212
      %v2316 = vunpack.c.l.b16 %v1213
      %v2317 = vunpack.c.h.b16 %v1213
      %v2318 = vunpack.c.l.b16 %v1214
      %v2319 = vunpack.c.h.b16 %v1214
      %v2320 = vunpack.c.l.b16 %v1215
      %v2321 = vunpack.c.h.b16 %v1215
      %v2322 = vunpack.c.l.b16 %v1216
      %v2323 = vunpack.c.h.b16 %v1216
      %v2324 = vunpack.c.l.b16 %v1217
      %v2325 = vunpack.c.h.b16 %v1217
      %v2326 = vunpack.c.l.b16 %v1218
      %v2327 = vunpack.c.h.b16 %v1218
      %v2328 = vunpack.c.l.b16 %v1219
      %v2329 = vunpack.c.h.b16 %v1219
      %v2330 = vunpack.c.l.b16 %v1220
      %v2331 = vunpack.c.h.b16 %v1220
      %v2332 = vunpack.c.l.b16 %v1221
      %v2333 = vunpack.c.h.b16 %v1221
      %v2334 = vunpack.c.l.b16 %v1222
      %v2335 = vunpack.c.h.b16 %v1222
      %v2336 = vunpack.c.l.b16 %v1223
      %v2337 = vunpack.c.h.b16 %v1223
      %v2338 = vunpack.c.l.b16 %v1224
      %v2339 = vunpack.c.h.b16 %v1224
      %v2340 = vunpack.c.l.b16 %v1225
      %v2341 = vunpack.c.h.b16 %v1225
      %v2342 = vunpack.c.l.b16 %v1226
      %v2343 = vunpack.c.h.b16 %v1226
      %v2344 = vunpack.c.l.b16 %v1227
      %v2345 = vunpack.c.h.b16 %v1227
      %v2346 = vunpack.c.l.b16 %v1228
      %v2347 = vunpack.c.h.b16 %v1228
      %v2348 = vunpack.c.l.b16 %v1229
      %v2349 = vunpack.c.h.b16 %v1229
      %v2350 = vunpack.c.l.b16 %v1230
      %v2351 = vunpack.c.h.b16 %v1230
      %v2352 = vunpack.c.l.b16 %v1231
      %v2353 = vunpack.c.h.b16 %v1231
      %v2354 = vunpack.c.l.b16 %v1232
      %v2355 = vunpack.c.h.b16 %v1232
      %v2356 = vunpack.c.l.b16 %v1233
      %v2357 = vunpack.c.h.b16 %v1233
      %v2358 = vunpack.c.l.b16 %v1234
      %v2359 = vunpack.c.h.b16 %v1234
      %v2360 = vunpack.c.l.b16 %v1235
      %v2361 = vunpack.c.h.b16 %v1235
      %v2362 = vunpack.c.l.b16 %v1236
      %v2363 = vunpack.c.h.b16 %v1236
      %v2364 = vunpack.c.l.b16 %v1237
      %v2365 = vunpack.c.h.b16 %v1237
      %v2366 = vpack.c.b16 %v2304, %v2302
      %v2367 = vpack.c.b16 %v2305, %v2303
      %v2368 = vpack.c.b16 %v2308, %v2306
      %v2369 = vpack.c.b16 %v2309, %v2307
      %v2370 = vpack.c.b16 %v2312, %v2310
      %v2371 = vpack.c.b16 %v2313, %v2311
      %v2372 = vpack.c.b16 %v2316, %v2314
      %v2373 = vpack.c.b16 %v2317, %v2315
      %v2374 = vpack.c.b16 %v2320, %v2318
      %v2375 = vpack.c.b16 %v2321, %v2319
      %v2376 = vpack.c.b16 %v2324, %v2322
      %v2377 = vpack.c.b16 %v2325, %v2323
      %v2378 = vpack.c.b16 %v2328, %v2326
      %v2379 = vpack.c.b16 %v2329, %v2327
      %v2380 = vpack.c.b16 %v2332, %v2330
      %v2381 = vpack.c.b16 %v2333, %v2331
      %v2382 = vpack.c.b16 %v2336, %v2334
      %v2383 = vpack.c.b16 %v2337, %v2335
      %v2384 = vpack.c.b16 %v2340, %v2338
      %v2385 = vpack.c.b16 %v2341, %v2339
      %v2386 = vpack.c.b16 %v2344, %v2342
      %v2387 = vpack.c.b16 %v2345, %v2343
      %v2388 = vpack.c.b16 %v2348, %v2346
      %v2389 = vpack.c.b16 %v2349, %v2347
      %v2390 = vpack.c.b16 %v2352, %v2350
      %v2391 = vpack.c.b16 %v2353, %v2351
      %v2392 = vpack.c.b16 %v2356, %v2354
      %v2393 = vpack.c.b16 %v2357, %v2355
      %v2394 = vpack.c.b16 %v2360, %v2358
      %v2395 = vpack.c.b16 %v2361, %v2359
      %v2396 = vpack.c.b16 %v2364, %v2362
      %v2397 = vpack.c.b16 %v2365, %v2363
      %2430 = vmatprep.subr.bf16.mxu0 %v2367
      %2431 = vmatpush1.bf16.msra.mxu0 %v2366
      %2432 = vmatprep.subr.bf16.mxu0 %v2369
      %2433 = vmatpush1.bf16.msra.mxu0 %v2368
      %2434 = vmatprep.subr.bf16.mxu0 %v2371
      %2435 = vmatpush1.bf16.msra.mxu0 %v2370
      %2436 = vmatprep.subr.bf16.mxu0 %v2373
      %2437 = vmatpush1.bf16.msra.mxu0 %v2372
      %2438 = vmatprep.subr.bf16.mxu0 %v2375
      %2439 = vmatpush1.bf16.msra.mxu0 %v2374
      %2440 = vmatprep.subr.bf16.mxu0 %v2377
      %2441 = vmatpush1.bf16.msra.mxu0 %v2376
      %2442 = vmatprep.subr.bf16.mxu0 %v2379
      %2443 = vmatpush1.bf16.msra.mxu0 %v2378
      %2444 = vmatprep.subr.bf16.mxu0 %v2381
      %2445 = vmatpush1.bf16.msra.mxu0 %v2380
      %2446 = vmatprep.subr.bf16.mxu0 %v2383
      %2447 = vmatpush1.bf16.msra.mxu0 %v2382
      %2448 = vmatprep.subr.bf16.mxu0 %v2385
      %2449 = vmatpush1.bf16.msra.mxu0 %v2384
      %2450 = vmatprep.subr.bf16.mxu0 %v2387
      %2451 = vmatpush1.bf16.msra.mxu0 %v2386
      %2452 = vmatprep.subr.bf16.mxu0 %v2389
      %2453 = vmatpush1.bf16.msra.mxu0 %v2388
      %2454 = vmatprep.subr.bf16.mxu0 %v2391
      %2455 = vmatpush1.bf16.msra.mxu0 %v2390
      %2456 = vmatprep.subr.bf16.mxu0 %v2393
      %2457 = vmatpush1.bf16.msra.mxu0 %v2392
      %2458 = vmatprep.subr.bf16.mxu0 %v2395
      %2459 = vmatpush1.bf16.msra.mxu0 %v2394
      %2460 = vmatprep.subr.bf16.mxu0 %v2397
      %2461 = vmatpush1.bf16.msra.mxu0 %v2396
      %2462 = vmatprep.mubr.f32.mxu0 %v2267
      %2463 = vmatmul.mubr.f32.gmra.mrb[0].mxu0 %v2266
      %v2464 = vpop.f32.mrb[0].mxu0
      %v2465 = vadd.f32 %v1882, %v2464
      %v2466 = vpop.f32.mrb[0].mxu0
      %v2467 = vadd.f32 %v1884, %v2466
      %2468 = vdwg.mxu0
      %v2469 = vld [vmem:[%s3] sm:$0x3]
      %v2471 = vlaneseq
      %v2472 = vshrl.u32 %v2471, 7
      %v2473 = vsub.s32 0, %v2472
      %v2474 = vrot.slane %v2469, %v2473
      %v2475 = vlaneseq
      %v2476 = vshrl.u32 %v2475, 7
      %v2477 = vsub.s32 1, %v2476
      %v2478 = vrot.slane %v2469, %v2477
      %v2481 = vadd.f32 %v2465, %v2474
      %v2482 = vadd.f32 %v2467, %v2478
      %v2483 = vmax.f32 %v2481, 0.0
      %v2484 = vmax.f32 %v2482, 0.0
      %v2485 = vld [vmem:[%s4] sm:$0xf]
      %v2486 = vld [vmem:[%s4 + $0x4] sm:$0xf]
      %v2487 = vld [vmem:[%s4 + $0x8] sm:$0xf]
      %v2488 = vld [vmem:[%s4 + $0xc] sm:$0xf]
      %v2489 = vld [vmem:[%s4 + $0x10] sm:$0xf]
      %v2490 = vld [vmem:[%s4 + $0x14] sm:$0xf]
      %v2491 = vld [vmem:[%s4 + $0x18] sm:$0xf]
      %v2492 = vld [vmem:[%s4 + $0x1c] sm:$0xf]
      %v2493 = vld [vmem:[%s4 + $0x20] sm:$0xf]
      %v2494 = vld [vmem:[%s4 + $0x24] sm:$0xf]
      %v2495 = vld [vmem:[%s4 + $0x28] sm:$0xf]
      %v2496 = vld [vmem:[%s4 + $0x2c] sm:$0xf]
      %v2497 = vld [vmem:[%s4 + $0x30] sm:$0xf]
      %v2498 = vld [vmem:[%s4 + $0x34] sm:$0xf]
      %v2499 = vld [vmem:[%s4 + $0x38] sm:$0xf]
      %v2500 = vld [vmem:[%s4 + $0x3c] sm:$0xf]
      %v2501 = vld [vmem:[%s4 + $0x40] sm:$0xf]
      %v2502 = vld [vmem:[%s4 + $0x44] sm:$0xf]
      %v2503 = vld [vmem:[%s4 + $0x48] sm:$0xf]
      %v2504 = vld [vmem:[%s4 + $0x4c] sm:$0xf]
      %v2505 = vld [vmem:[%s4 + $0x50] sm:$0xf]
      %v2506 = vld [vmem:[%s4 + $0x54] sm:$0xf]
      %v2507 = vld [vmem:[%s4 + $0x58] sm:$0xf]
      %v2508 = vld [vmem:[%s4 + $0x5c] sm:$0xf]
      %v2509 = vld [vmem:[%s4 + $0x60] sm:$0xf]
      %v2510 = vld [vmem:[%s4 + $0x64] sm:$0xf]
      %v2511 = vld [vmem:[%s4 + $0x68] sm:$0xf]
      %v2512 = vld [vmem:[%s4 + $0x6c] sm:$0xf]
      %v2513 = vld [vmem:[%s4 + $0x70] sm:$0xf]
      %v2514 = vld [vmem:[%s4 + $0x74] sm:$0xf]
      %v2515 = vld [vmem:[%s4 + $0x78] sm:$0xf]
      %v2516 = vld [vmem:[%s4 + $0x7c] sm:$0xf]
      %v2517 = vld [vmem:[%s5] sm:$0x1]
      %v2519 = vlaneseq
      %v2520 = vshrl.u32 %v2519, 7
      %v2521 = vsub.s32 0, %v2520
      %v2522 = vrot.slane %v2517, %v2521
      %v2556 = vunpack.c.l.b16 %v2485
      %v2557 = vunpack.c.l.b16 %v2486
      %v2558 = vunpack.c.l.b16 %v2487
      %v2559 = vunpack.c.l.b16 %v2488
      %v2560 = vunpack.c.l.b16 %v2489
      %v2561 = vunpack.c.l.b16 %v2490
      %v2562 = vunpack.c.l.b16 %v2491
      %v2563 = vunpack.c.l.b16 %v2492
      %v2564 = vunpack.c.l.b16 %v2493
      %v2565 = vunpack.c.l.b16 %v2494
      %v2566 = vunpack.c.l.b16 %v2495
      %v2567 = vunpack.c.l.b16 %v2496
      %v2568 = vunpack.c.l.b16 %v2497
      %v2569 = vunpack.c.l.b16 %v2498
      %v2570 = vunpack.c.l.b16 %v2499
      %v2571 = vunpack.c.l.b16 %v2500
      %v2572 = vunpack.c.l.b16 %v2501
      %v2573 = vunpack.c.l.b16 %v2502
      %v2574 = vunpack.c.l.b16 %v2503
      %v2575 = vunpack.c.l.b16 %v2504
      %v2576 = vunpack.c.l.b16 %v2505
      %v2577 = vunpack.c.l.b16 %v2506
      %v2578 = vunpack.c.l.b16 %v2507
      %v2579 = vunpack.c.l.b16 %v2508
      %v2580 = vunpack.c.l.b16 %v2509
      %v2581 = vunpack.c.l.b16 %v2510
      %v2582 = vunpack.c.l.b16 %v2511
      %v2583 = vunpack.c.l.b16 %v2512
      %v2584 = vunpack.c.l.b16 %v2513
      %v2585 = vunpack.c.l.b16 %v2514
      %v2586 = vunpack.c.l.b16 %v2515
      %v2587 = vunpack.c.l.b16 %v2516
      %v2588 = vpack.c.b16 %v2557, %v2556
      %v2589 = vpack.c.b16 %v2559, %v2558
      %v2590 = vpack.c.b16 %v2561, %v2560
      %v2591 = vpack.c.b16 %v2563, %v2562
      %v2592 = vpack.c.b16 %v2565, %v2564
      %v2593 = vpack.c.b16 %v2567, %v2566
      %v2594 = vpack.c.b16 %v2569, %v2568
      %v2595 = vpack.c.b16 %v2571, %v2570
      %v2596 = vpack.c.b16 %v2573, %v2572
      %v2597 = vpack.c.b16 %v2575, %v2574
      %v2598 = vpack.c.b16 %v2577, %v2576
      %v2599 = vpack.c.b16 %v2579, %v2578
      %v2600 = vpack.c.b16 %v2581, %v2580
      %v2601 = vpack.c.b16 %v2583, %v2582
      %v2602 = vpack.c.b16 %v2585, %v2584
      %v2603 = vpack.c.b16 %v2587, %v2586
      %2620 = vmatprep.subr.bf16.mxu0 0
      %2621 = vmatpush1.bf16.msra.mxu0 %v2588
      %2622 = vmatprep.subr.bf16.mxu0 0
      %2623 = vmatpush1.bf16.msra.mxu0 %v2589
      %2624 = vmatprep.subr.bf16.mxu0 0
      %2625 = vmatpush1.bf16.msra.mxu0 %v2590
      %2626 = vmatprep.subr.bf16.mxu0 0
      %2627 = vmatpush1.bf16.msra.mxu0 %v2591
      %2628 = vmatprep.subr.bf16.mxu0 0
      %2629 = vmatpush1.bf16.msra.mxu0 %v2592
      %2630 = vmatprep.subr.bf16.mxu0 0
      %2631 = vmatpush1.bf16.msra.mxu0 %v2593
      %2632 = vmatprep.subr.bf16.mxu0 0
      %2633 = vmatpush1.bf16.msra.mxu0 %v2594
      %2634 = vmatprep.subr.bf16.mxu0 0
      %2635 = vmatpush1.bf16.msra.mxu0 %v2595
      %2636 = vmatprep.subr.bf16.mxu0 0
      %2637 = vmatpush1.bf16.msra.mxu0 %v2596
      %2638 = vmatprep.subr.bf16.mxu0 0
      %2639 = vmatpush1.bf16.msra.mxu0 %v2597
      %2640 = vmatprep.subr.bf16.mxu0 0
      %2641 = vmatpush1.bf16.msra.mxu0 %v2598
      %2642 = vmatprep.subr.bf16.mxu0 0
      %2643 = vmatpush1.bf16.msra.mxu0 %v2599
      %2644 = vmatprep.subr.bf16.mxu0 0
      %2645 = vmatpush1.bf16.msra.mxu0 %v2600
      %2646 = vmatprep.subr.bf16.mxu0 0
      %2647 = vmatpush1.bf16.msra.mxu0 %v2601
      %2648 = vmatprep.subr.bf16.mxu0 0
      %2649 = vmatpush1.bf16.msra.mxu0 %v2602
      %2650 = vmatprep.subr.bf16.mxu0 0
      %2651 = vmatpush1.bf16.msra.mxu0 %v2603
      %2652 = vmatprep.mubr.f32.mxu0 %v2484
      %2653 = vmatmul.mubr.f32.gmra.mrb[0].mxu0 %v2483
      %v2654 = vpop.f32.mrb[0].mxu0
      %v2655 = vadd.f32 %v2522, %v2654
      %v2656 = vpop.f32.mrb[0].mxu0
      %2657 = vdwg.mxu0
      %v2658 = vmax.f32 %v2655, 0.0
      %v2659 = vld [vmem:[%s6] sm:$0xf]
      %v2660 = vld [vmem:[%s6 + $0x4] sm:$0xf]
      %v2661 = vld [vmem:[%s6 + $0x8] sm:$0xf]
      %v2662 = vld [vmem:[%s6 + $0xc] sm:$0xf]
      %v2663 = vld [vmem:[%s6 + $0x10] sm:$0xf]
      %v2664 = vld [vmem:[%s6 + $0x14] sm:$0xf]
      %v2665 = vld [vmem:[%s6 + $0x18] sm:$0xf]
      %v2666 = vld [vmem:[%s6 + $0x1c] sm:$0xf]
      %v2667 = vld [vmem:[%s7] sm:$0x1]
      %v2669 = vlaneseq
      %v2670 = vshrl.u32 %v2669, 7
      %v2671 = vsub.s32 0, %v2670
      %v2672 = vrot.slane %v2667, %v2671
      %v2682 = vunpack.c.l.b16 %v2659
      %v2683 = vunpack.c.l.b16 %v2660
      %v2684 = vunpack.c.l.b16 %v2661
      %v2685 = vunpack.c.l.b16 %v2662
      %v2686 = vunpack.c.l.b16 %v2663
      %v2687 = vunpack.c.l.b16 %v2664
      %v2688 = vunpack.c.l.b16 %v2665
      %v2689 = vunpack.c.l.b16 %v2666
      %v2690 = vpack.c.b16 %v2683, %v2682
      %v2691 = vpack.c.b16 %v2685, %v2684
      %v2692 = vpack.c.b16 %v2687, %v2686
      %v2693 = vpack.c.b16 %v2689, %v2688
      %vm2698 = vcmask 523264
      %v2700 = vsel %vm2698, %v2658, 0
      %2702 = vmatprep.subr.bf16.mxu0 0
      %2703 = vmatpush1.bf16.msra.mxu0 %v2690
      %2704 = vmatprep.subr.bf16.mxu0 0
      %2705 = vmatpush1.bf16.msra.mxu0 %v2691
      %2706 = vmatprep.subr.bf16.mxu0 0
      %2707 = vmatpush1.bf16.msra.mxu0 %v2692
      %2708 = vmatprep.subr.bf16.mxu0 0
      %2709 = vmatpush1.bf16.msra.mxu0 %v2693
      %2710 = vmatprep.subr.bf16.mxu0 0
      %2711 = vmatpush1.bf16.msra.mxu0 0
      %2712 = vmatprep.subr.bf16.mxu0 0
      %2713 = vmatpush1.bf16.msra.mxu0 0
      %2714 = vmatprep.subr.bf16.mxu0 0
      %2715 = vmatpush1.bf16.msra.mxu0 0
      %2716 = vmatprep.subr.bf16.mxu0 0
      %2717 = vmatpush1.bf16.msra.mxu0 0
      %2718 = vmatprep.subr.bf16.mxu0 0
      %2719 = vmatpush1.bf16.msra.mxu0 0
      %2720 = vmatprep.subr.bf16.mxu0 0
      %2721 = vmatpush1.bf16.msra.mxu0 0
      %2722 = vmatprep.subr.bf16.mxu0 0
      %2723 = vmatpush1.bf16.msra.mxu0 0
      %2724 = vmatprep.subr.bf16.mxu0 0
      %2725 = vmatpush1.bf16.msra.mxu0 0
      %2726 = vmatprep.subr.bf16.mxu0 0
      %2727 = vmatpush1.bf16.msra.mxu0 0
      %2728 = vmatprep.subr.bf16.mxu0 0
      %2729 = vmatpush1.bf16.msra.mxu0 0
      %2730 = vmatprep.subr.bf16.mxu0 0
      %2731 = vmatpush1.bf16.msra.mxu0 0
      %2732 = vmatprep.subr.bf16.mxu0 0
      %2733 = vmatpush1.bf16.msra.mxu0 0
      %2734 = vmatprep.mubr.f32.mxu0 0.0
      %2735 = vmatmul.mubr.f32.gmra.mrb[0].mxu0 %v2700
      %v2736 = vpop.f32.mrb[0].mxu0
      %v2737 = vadd.f32 %v2672, %v2736
      %v2738 = vpop.f32.mrb[0].mxu0
      %2739 = vdwg.mxu0
      %2740 = vst [vmem:[%s308] sm:$0x3] %v2737
      %p2741 = scmp.lt.s32.totalorder %s19, 1
      %s2742 = scalar_select %p2741, %s19, 1
      %s2743 = smul.addr %s2742, 2
      %s2744 = scalar_lea.vmem %s8, %s2743
      // Predicated region
      $region53: #{surv_network_forward.1} parent=51 // pred_check
        %p2745 = pneg %p210
      $region54: #{surv_network_forward.1} parent=51 // pred_check_branch
        %2747 = sbr.rel (%p2745) target = $region56
      $region55: #{surv_network_forward.1} parent=51 // pred_region
        _
      $region56: #{surv_network_forward.1} parent=51 // pred_fallthru
        _
    $region52: #{surv_network_forward.1} parent=5 // pred_fallthru
      _
    %p2748 = scmp.le.s32.totalorder 2, %s14
    // Predicated region
    $region57: #{surv_network_forward.1} parent=5 // pred_check
      %p2749 = pneg %p2748
    $region58: #{surv_network_forward.1} parent=5 // pred_check_branch
      %2751 = sbr.rel (%p2749) target = $region60
    $region59: #{surv_network_forward.1} parent=5 // pred_region
      %s2752 = ssub.s32 %s14, 2
      // Predicated region
      $region61: #{surv_network_forward.1} parent=59 // pred_check
        %p2753 = pneg %p216
      $region62: #{surv_network_forward.1} parent=59 // pred_check_branch
        %2755 = sbr.rel (%p2753) target = $region64
      $region63: #{surv_network_forward.1} parent=59 // pred_region
        %p2756 = scmp.lt.s32.totalorder %s20, 1
        %s2757 = scalar_select %p2756, %s20, 1
        %s2758 = smul.addr %s2757, 2
        %s2759 = scalar_lea.vmem %s8, %s2758
      $region64: #{surv_network_forward.1} parent=59 // pred_fallthru
        _
    $region60: #{surv_network_forward.1} parent=5 // pred_fallthru
      _
  $region6: #{surv_network_forward.1} parent=0 // loop_footer
    %s18 = sadd.s32 1, %s14
  $region7: #{surv_network_forward.1} parent=0 // loop_footer_branch
    %13 = sbr.rel target = $region3
  $region8: #{surv_network_forward.1} parent=0 // loop_exit
    _

</llo_original>
